<compile_context>
chip_gen: v6e
topology: v6e:2x2x1
jax: 0.10.0
libtpu: 0.0.40
codegen_flags: <defaults>
</compile_context>

<pallas_src>
import jax
import jax.numpy as jnp
from jax.experimental import pallas as pl
from jax.experimental.pallas import tpu as pltpu

EPS = 1e-5  # ComplexBatchNorm2d default

_X_LINEARS = ("w1", "w2", "w3")   # input  -> hidden
_H_LINEARS = ("r1", "r2", "r3")   # hidden -> hidden


# --------------------------------------------------------------------------
# Pallas kernel
# --------------------------------------------------------------------------
def _bngru_cell_kernel(bn_ref, xin_ref, hin_ref, wx_ref, wh_ref,
                       bx_ref, bh_ref, out_ref):
    """Fused ComplexBNGRUCell forward.

    bn_ref : SMEM (5,) f32        -- [w0, w1, w2, b0, b1] of ComplexBatchNorm2d(1)
    xin_ref: VMEM (M, 2*IN) bf16  -- packed [x_re | x_im]  (M = N*S rows)
    hin_ref: VMEM (M, 2*HD) bf16  -- packed [h_re | h_im]
    wx_ref : VMEM (2*IN, 6*HD) bf16 -- 3 gates of block weights [[wr,wi],[-wi,wr]]
    wh_ref : VMEM (2*HD, 6*HD) bf16
    bx_ref : VMEM (1, 6*HD) f32   -- per gate [br-bi | br+bi]
    bh_ref : VMEM (1, 6*HD) f32
    out_ref: VMEM (M, 6*HD) f32   -- [r_re | r_im | z_re | z_im | n_re | n_im]
    """
    M = xin_ref.shape[0]
    HD = out_ref.shape[1] // 6

    w0 = bn_ref[0]
    w1 = bn_ref[1]
    w2 = bn_ref[2]
    b0 = bn_ref[3]
    b1 = bn_ref[4]

    # --- 2 fused MXU matmuls: bf16 operands, f32 accumulation ------------
    xlin = jnp.dot(xin_ref[...], wx_ref[...],
                   preferred_element_type=jnp.float32) + bx_ref[...]
    hlin = jnp.dot(hin_ref[...], wh_ref[...],
                   preferred_element_type=jnp.float32) + bh_ref[...]

    ones_row = jnp.ones((1, M), jnp.float32)

    def cbn(yr, yi):
        # Complex whitening BN, num_features=1 -> scalar stats over the whole
        # tensor.  The M-axis reduction runs on the MXU (ones @ stats), the
        # remaining lane reduce is tiny.  Whitening 2x2 + affine + mean
        # subtraction fold into one 2x2 scale + shift per tensor.
        # One-pass E[x^2]-m^2 form; inputs are roughly centered matmul outputs.
        W = yr.shape[1]
        inv_n = 1.0 / float(M * W)
        stat = jnp.concatenate([yr, yi, yr * yr, yi * yi, yr * yi], axis=-1)
        csum = jnp.dot(ones_row, stat, preferred_element_type=jnp.float32)
        mr = jnp.sum(csum[:, 0 * W:1 * W]) * inv_n
        mi = jnp.sum(csum[:, 1 * W:2 * W]) * inv_n
        crr = jnp.sum(csum[:, 2 * W:3 * W]) * inv_n - mr * mr + EPS
        cii = jnp.sum(csum[:, 3 * W:4 * W]) * inv_n - mi * mi + EPS
        cri = jnp.sum(csum[:, 4 * W:5 * W]) * inv_n - mr * mi
        s = jnp.sqrt(crr * cii - cri * cri)
        t = jnp.sqrt(crr + cii + 2.0 * s)
        inv_st = 1.0 / (s * t)          # scalar divide (2 per BN): negligible
        rrr = (cii + s) * inv_st
        rii = (crr + s) * inv_st
        rri = -cri * inv_st
        a_rr = w0 * rrr + w2 * rri
        a_ri = w0 * rri + w2 * rii
        a_ir = w2 * rrr + w1 * rri
        a_ii = w2 * rri + w1 * rii
        c_r = b0 - a_rr * mr - a_ri * mi
        c_i = b1 - a_ir * mr - a_ii * mi
        return a_rr * yr + a_ri * yi + c_r, a_ir * yr + a_ii * yi + c_i

    def csig(v):
        # Divide-free sigmoid: one EUP tanh + mul/add, no VALU divide.
        return 0.5 * (jnp.tanh(0.5 * v) + 1.0)

    def gate(lin, g):
        return (lin[:, 2 * g * HD:(2 * g + 1) * HD],
                lin[:, (2 * g + 1) * HD:(2 * g + 2) * HD])

    # --- reset gate: r = csigmoid(bn(x1) + bn(h1)) ------------------------
    x1r, x1i = gate(xlin, 0)
    h1r, h1i = gate(hlin, 0)
    bx1r, bx1i = cbn(x1r, x1i)
    bh1r, bh1i = cbn(h1r, h1i)
    r_r = csig(bx1r + bh1r)
    r_i = csig(bx1i + bh1i)

    # --- update gate: z = csigmoid(bn(h2) + bn(x2)) -----------------------
    x2r, x2i = gate(xlin, 1)
    h2r, h2i = gate(hlin, 1)
    bh2r, bh2i = cbn(h2r, h2i)
    bx2r, bx2i = cbn(x2r, x2i)
    z_r = csig(bh2r + bx2r)
    z_i = csig(bh2i + bx2i)

    # --- candidate: n = ctanh(bn(bn(x3) + r * bn(h3))) --------------------
    x3r, x3i = gate(xlin, 2)
    h3r, h3i = gate(hlin, 2)
    bh3r, bh3i = cbn(h3r, h3i)
    g_r = r_r * bh3r - r_i * bh3i        # complex multiply r * bn(h3)
    g_i = r_r * bh3i + r_i * bh3r
    bx3r, bx3i = cbn(x3r, x3i)
    s_r, s_i = cbn(bx3r + g_r, bx3i + g_i)
    n_r = jnp.tanh(s_r)
    n_i = jnp.tanh(s_i)

    # Single lane-dense store of the whole (M, 6*HD) slab.
    out_ref[...] = jnp.concatenate([r_r, r_i, z_r, z_i, n_r, n_i], axis=-1)


# --------------------------------------------------------------------------
# Parameter packing (once per model, NOT per timestep)
# --------------------------------------------------------------------------
def prepare_params(params):
    f32 = jnp.float32

    def block_w(name):
        wr = params[name + "_wr"].astype(f32).T          # (in, hid)
        wi = params[name + "_wi"].astype(f32).T
        top = jnp.concatenate([wr, wi], axis=1)           # (in, 2*hid)
        bot = jnp.concatenate([-wi, wr], axis=1)
        return jnp.concatenate([top, bot], axis=0)         # (2*in, 2*hid)

    def bias2(name):
        br = params[name + "_br"].astype(f32)
        bi = params[name + "_bi"].astype(f32)
        return jnp.concatenate([br - bi, br + bi])          # (2*hid,)

    wx = jnp.concatenate([block_w(n) for n in _X_LINEARS], axis=1).astype(jnp.bfloat16)
    wh = jnp.concatenate([block_w(n) for n in _H_LINEARS], axis=1).astype(jnp.bfloat16)
    bx = jnp.concatenate([bias2(n) for n in _X_LINEARS])[None, :].astype(f32)
    bh = jnp.concatenate([bias2(n) for n in _H_LINEARS])[None, :].astype(f32)
    bn = jnp.concatenate([params["bn_w"][0], params["bn_b"][0]]).astype(f32)
    return {"wx": wx, "wh": wh, "bx": bx, "bh": bh, "bn": bn}


# --------------------------------------------------------------------------
# Per-timestep wrapper
# --------------------------------------------------------------------------
@jax.jit
def complex_bn_gru_cell(x, h, packed):
    """x: (N, 1, S, IN) complex64, h: (N, 1, S, HD) complex64.

    Returns (r, z, n), each (N, 1, S, HD) complex64.
    """
    N, C, S, IN = x.shape
    HD = h.shape[-1]
    M = N * C * S
    f32 = jnp.float32

    # C == 1 makes the per-channel BN statistics global, so flattening rows is
    # a pure reshape (no transposes).  Data is already on the bf16 grid ->
    # casting the matmul operands to bf16 is lossless here.
    xin = jnp.concatenate([jnp.real(x).reshape(M, IN),
                           jnp.imag(x).reshape(M, IN)], axis=1).astype(jnp.bfloat16)
    hin = jnp.concatenate([jnp.real(h).reshape(M, HD),
                           jnp.imag(h).reshape(M, HD)], axis=1).astype(jnp.bfloat16)

    full = lambda shape: pl.BlockSpec(shape, lambda: (0,) * len(shape))

    out = pl.pallas_call(
        _bngru_cell_kernel,
        out_shape=jax.ShapeDtypeStruct((M, 6 * HD), f32),
        grid=(),
        in_specs=[
            pl.BlockSpec(memory_space=pltpu.MemorySpace.SMEM),   # BN scalars
            full((M, 2 * IN)), full((M, 2 * HD)),
            full((2 * IN, 6 * HD)), full((2 * HD, 6 * HD)),
            full((1, 6 * HD)), full((1, 6 * HD)),
        ],
        out_specs=full((M, 6 * HD)),
    )(packed["bn"], xin, hin, packed["wx"], packed["wh"], packed["bx"], packed["bh"])

    def cplx(g):
        re = out[:, 2 * g * HD:(2 * g + 1) * HD]
        im = out[:, (2 * g + 1) * HD:(2 * g + 2) * HD]
        return (re + 1j * im).astype(jnp.complex64).reshape(N, C, S, HD)

    return cplx(0), cplx(1), cplx(2)


# --------------------------------------------------------------------------
# Pure-JAX reference (mirrors the PyTorch module op-by-op)
# --------------------------------------------------------------------------
def _ref_clinear(u, wr, br, wi, bi):
    hp = jax.lax.Precision.HIGHEST
    fr = lambda v: jnp.matmul(v, wr.T, precision=hp) + br
    fi = lambda v: jnp.matmul(v, wi.T, precision=hp) + bi
    real = fr(jnp.real(u)) - fi(jnp.imag(u))
    imag = fr(jnp.imag(u)) + fi(jnp.real(u))
    return (real + 1j * imag).astype(jnp.complex64)


def _ref_cbn(u, w, b, eps=EPS):
    xr = jnp.real(u).astype(jnp.float32)
    xi = jnp.imag(u).astype(jnp.float32)
    axes = (0, 2, 3)
    bc = lambda v: v[None, :, None, None]
    mr = xr.mean(axes)
    mi = xi.mean(axes)
    cr = xr - bc(mr)
    ci = xi - bc(mi)
    crr = (cr * cr).mean(axes) + eps
    cii = (ci * ci).mean(axes) + eps
    cri = (cr * ci).mean(axes)
    s = jnp.sqrt(crr * cii - cri * cri)
    t = jnp.sqrt(crr + cii + 2.0 * s)
    inv = 1.0 / (s * t)
    rrr = (cii + s) * inv
    rii = (crr + s) * inv
    rri = -cri * inv
    wr_ = bc(rrr) * cr + bc(rri) * ci
    wi_ = bc(rii) * ci + bc(rri) * cr
    o_r = bc(w[:, 0]) * wr_ + bc(w[:, 2]) * wi_ + bc(b[:, 0])
    o_i = bc(w[:, 2]) * wr_ + bc(w[:, 1]) * wi_ + bc(b[:, 1])
    return (o_r + 1j * o_i).astype(jnp.complex64)


def _reference_cell(x, h, params):
    lin = lambda u, n: _ref_clinear(u, params[n + "_wr"], params[n + "_br"],
                                    params[n + "_wi"], params[n + "_bi"])
    bn = lambda u: _ref_cbn(u, params["bn_w"], params["bn_b"])
    csig = lambda u: (jax.nn.sigmoid(jnp.real(u))
                      + 1j * jax.nn.sigmoid(jnp.imag(u))).astype(jnp.complex64)
    ctanh = lambda u: (jnp.tanh(jnp.real(u))
                       + 1j * jnp.tanh(jnp.imag(u))).astype(jnp.complex64)

    r = csig(bn(lin(x, "w1")) + bn(lin(h, "r1")))
    z = csig(bn(lin(h, "r2")) + bn(lin(x, "w2")))
    h3 = r * bn(lin(h, "r3"))
    n = ctanh(bn(bn(lin(x, "w3")) + h3))
    return r, z, n


# --------------------------------------------------------------------------
# Test harness
# --------------------------------------------------------------------------
def _init_params(key, in_features, hidden_features):
    params = {}
    keys = jax.random.split(key, 25)
    idx = 0
    fan_ins = [(n, in_features) for n in _X_LINEARS] + \
              [(n, hidden_features) for n in _H_LINEARS]
    for name, fan_in in fan_ins:
        s = 1.0 / (fan_in ** 0.5)
        for part, shape in (("wr", (hidden_features, fan_in)),
                            ("wi", (hidden_features, fan_in)),
                            ("br", (hidden_features,)),
                            ("bi", (hidden_features,))):
            params[f"{name}_{part}"] = jax.random.uniform(
                keys[idx], shape, minval=-s, maxval=s, dtype=jnp.float32)
            idx += 1
    # ComplexBatchNorm2d(1) affine init is (1/sqrt2, 1/sqrt2, 0) / zero bias;
    # perturb deterministically to exercise the full affine path.
    inv_sqrt2 = 1.0 / (2.0 ** 0.5)
    noise = 0.05 * jax.random.normal(keys[idx], (5,), dtype=jnp.float32)
    params["bn_w"] = jnp.array([[inv_sqrt2, inv_sqrt2, 0.0]], jnp.float32) + noise[:3][None]
    params["bn_b"] = jnp.zeros((1, 2), jnp.float32) + noise[3:][None]
    return params


def _bf16_grid(v):
    # Quantize to the bf16 grid so the kernel's bf16-operand MXU matmuls and
    # the f32 XLA reference matmuls see identical operand values.
    return v.astype(jnp.bfloat16).astype(jnp.float32)


if __name__ == "__main__":
    key = jax.random.PRNGKey(0)
    kx1, kx2, kh1, kh2, kp = jax.random.split(key, 5)

    N, C, S = 2, 1, 8          # ComplexBatchNorm2d(1) forces channel dim = 1
    IN_FEATURES, HIDDEN = 16, 32

    x = (_bf16_grid(jax.random.normal(kx1, (N, C, S, IN_FEATURES), jnp.float32))
         + 1j * _bf16_grid(jax.random.normal(kx2, (N, C, S, IN_FEATURES), jnp.float32))
         ).astype(jnp.complex64)
    h = (_bf16_grid(jax.random.normal(kh1, (N, C, S, HIDDEN), jnp.float32))
         + 1j * _bf16_grid(jax.random.normal(kh2, (N, C, S, HIDDEN), jnp.float32))
         ).astype(jnp.complex64)
    params = jax.tree_util.tree_map(_bf16_grid, _init_params(kp, IN_FEATURES, HIDDEN))

    packed = prepare_params(params)            # once per model, not per step
    r, z, n = complex_bn_gru_cell(x, h, packed)
    r, z, n = jax.block_until_ready((r, z, n))

    r_ref, z_ref, n_ref = _reference_cell(x, h, params)

    for got, ref, name in ((r, r_ref, "r"), (z, z_ref, "z"), (n, n_ref, "n")):
        assert got.shape == (N, C, S, HIDDEN) and got.dtype == jnp.complex64, name
        assert jnp.allclose(jnp.real(got), jnp.real(ref), atol=5e-4, rtol=5e-4), name
        assert jnp.allclose(jnp.imag(got), jnp.imag(ref), atol=5e-4, rtol=5e-4), name

    print("KERNEL_OK")
</pallas_src>

<mosaic_0001>
module attributes {stable_mosaic.version = 11 : i64} {
  func.func @_bngru_cell_kernel(%arg0: memref<5xf32, #tpu.memory_space<smem>>, %arg1: memref<16x32xbf16, #tpu.memory_space<vmem>>, %arg2: memref<16x64xbf16, #tpu.memory_space<vmem>>, %arg3: memref<32x192xbf16, #tpu.memory_space<vmem>>, %arg4: memref<64x192xbf16, #tpu.memory_space<vmem>>, %arg5: memref<1x192xf32, #tpu.memory_space<vmem>>, %arg6: memref<1x192xf32, #tpu.memory_space<vmem>>, %arg7: memref<16x192xf32, #tpu.memory_space<vmem>>) attributes {dimension_semantics = [], scalar_prefetch = 0 : i64, scratch_operands = 0 : i64, tpu.core_type = #tpu.core_type<tc>} {
    %c0 = arith.constant 0 : index
    %0 = memref.load %arg0[%c0] : memref<5xf32, #tpu.memory_space<smem>>
    %c1 = arith.constant 1 : index
    %1 = memref.load %arg0[%c1] : memref<5xf32, #tpu.memory_space<smem>>
    %c2 = arith.constant 2 : index
    %2 = memref.load %arg0[%c2] : memref<5xf32, #tpu.memory_space<smem>>
    %c3 = arith.constant 3 : index
    %3 = memref.load %arg0[%c3] : memref<5xf32, #tpu.memory_space<smem>>
    %c4 = arith.constant 4 : index
    %4 = memref.load %arg0[%c4] : memref<5xf32, #tpu.memory_space<smem>>
    %c0_0 = arith.constant 0 : index
    %c0_1 = arith.constant 0 : index
    %5 = vector.load %arg1[%c0_0, %c0_1] : memref<16x32xbf16, #tpu.memory_space<vmem>>, vector<16x32xbf16>
    %c0_2 = arith.constant 0 : index
    %c0_3 = arith.constant 0 : index
    %6 = vector.load %arg3[%c0_2, %c0_3] : memref<32x192xbf16, #tpu.memory_space<vmem>>, vector<32x192xbf16>
    %cst = arith.constant dense<0.000000e+00> : vector<16x192xf32>
    %7 = tpu.matmul %5, %6, %cst {dimension_numbers = #tpu.dot_dimension_numbers<[1], [0], [0], [1], [0, 0, 1, 1], [], []>} : vector<16x32xbf16>, vector<32x192xbf16>, vector<16x192xf32> -> vector<16x192xf32>
    %c0_4 = arith.constant 0 : index
    %c0_5 = arith.constant 0 : index
    %8 = vector.load %arg5[%c0_4, %c0_5] : memref<1x192xf32, #tpu.memory_space<vmem>>, vector<1x192xf32>
    %9 = vector.broadcast %8 : vector<1x192xf32> to vector<16x192xf32>
    %10 = arith.addf %7, %9 : vector<16x192xf32>
    %c0_6 = arith.constant 0 : index
    %c0_7 = arith.constant 0 : index
    %11 = vector.load %arg2[%c0_6, %c0_7] : memref<16x64xbf16, #tpu.memory_space<vmem>>, vector<16x64xbf16>
    %c0_8 = arith.constant 0 : index
    %c0_9 = arith.constant 0 : index
    %12 = vector.load %arg4[%c0_8, %c0_9] : memref<64x192xbf16, #tpu.memory_space<vmem>>, vector<64x192xbf16>
    %cst_10 = arith.constant dense<0.000000e+00> : vector<16x192xf32>
    %13 = tpu.matmul %11, %12, %cst_10 {dimension_numbers = #tpu.dot_dimension_numbers<[1], [0], [0], [1], [0, 0, 1, 1], [], []>} : vector<16x64xbf16>, vector<64x192xbf16>, vector<16x192xf32> -> vector<16x192xf32>
    %c0_11 = arith.constant 0 : index
    %c0_12 = arith.constant 0 : index
    %14 = vector.load %arg6[%c0_11, %c0_12] : memref<1x192xf32, #tpu.memory_space<vmem>>, vector<1x192xf32>
    %15 = vector.broadcast %14 : vector<1x192xf32> to vector<16x192xf32>
    %16 = arith.addf %13, %15 : vector<16x192xf32>
    %cst_13 = arith.constant 1.000000e+00 : f32
    %17 = vector.broadcast %cst_13 : f32 to vector<1x16xf32>
    %18 = vector.extract_strided_slice %10 {offsets = [0, 0], sizes = [16, 32], strides = [1, 1]} : vector<16x192xf32> to vector<16x32xf32>
    %19 = vector.extract_strided_slice %10 {offsets = [0, 32], sizes = [16, 32], strides = [1, 1]} : vector<16x192xf32> to vector<16x32xf32>
    %20 = vector.extract_strided_slice %16 {offsets = [0, 0], sizes = [16, 32], strides = [1, 1]} : vector<16x192xf32> to vector<16x32xf32>
    %21 = vector.extract_strided_slice %16 {offsets = [0, 32], sizes = [16, 32], strides = [1, 1]} : vector<16x192xf32> to vector<16x32xf32>
    %22 = arith.mulf %18, %18 : vector<16x32xf32>
    %23 = arith.mulf %19, %19 : vector<16x32xf32>
    %24 = arith.mulf %18, %19 : vector<16x32xf32>
    %25 = tpu.concatenate %18, %19, %22, %23, %24 in 1 : vector<16x32xf32>, vector<16x32xf32>, vector<16x32xf32>, vector<16x32xf32>, vector<16x32xf32> -> vector<16x160xf32>
    %cst_14 = arith.constant dense<0.000000e+00> : vector<1x160xf32>
    %26 = tpu.matmul %17, %25, %cst_14 {dimension_numbers = #tpu.dot_dimension_numbers<[1], [0], [0], [1], [0, 0, 1, 1], [], []>} : vector<1x16xf32>, vector<16x160xf32>, vector<1x160xf32> -> vector<1x160xf32>
    %27 = vector.extract_strided_slice %26 {offsets = [0, 0], sizes = [1, 32], strides = [1, 1]} : vector<1x160xf32> to vector<1x32xf32>
    %28 = vector.shape_cast %27 : vector<1x32xf32> to vector<1x1x32xf32>
    %cst_15 = arith.constant dense<0.000000e+00> : vector<1xf32>
    %29 = vector.multi_reduction <add>, %28, %cst_15 [1, 2] : vector<1x1x32xf32> to vector<1xf32>
    %30 = vector.shape_cast %29 : vector<1xf32> to vector<1x1x1xf32>
    %31 = vector.extract %30[0, 0, 0] : f32 from vector<1x1x1xf32>
    %cst_16 = arith.constant 0.001953125 : f32
    %32 = arith.mulf %31, %cst_16 : f32
    %33 = vector.extract_strided_slice %26 {offsets = [0, 32], sizes = [1, 32], strides = [1, 1]} : vector<1x160xf32> to vector<1x32xf32>
    %34 = vector.shape_cast %33 : vector<1x32xf32> to vector<1x1x32xf32>
    %cst_17 = arith.constant dense<0.000000e+00> : vector<1xf32>
    %35 = vector.multi_reduction <add>, %34, %cst_17 [1, 2] : vector<1x1x32xf32> to vector<1xf32>
    %36 = vector.shape_cast %35 : vector<1xf32> to vector<1x1x1xf32>
    %37 = vector.extract %36[0, 0, 0] : f32 from vector<1x1x1xf32>
    %cst_18 = arith.constant 0.001953125 : f32
    %38 = arith.mulf %37, %cst_18 : f32
    %39 = vector.extract_strided_slice %26 {offsets = [0, 64], sizes = [1, 32], strides = [1, 1]} : vector<1x160xf32> to vector<1x32xf32>
    %40 = vector.shape_cast %39 : vector<1x32xf32> to vector<1x1x32xf32>
    %cst_19 = arith.constant dense<0.000000e+00> : vector<1xf32>
    %41 = vector.multi_reduction <add>, %40, %cst_19 [1, 2] : vector<1x1x32xf32> to vector<1xf32>
    %42 = vector.shape_cast %41 : vector<1xf32> to vector<1x1x1xf32>
    %43 = vector.extract %42[0, 0, 0] : f32 from vector<1x1x1xf32>
    %cst_20 = arith.constant 0.001953125 : f32
    %44 = arith.mulf %43, %cst_20 : f32
    %45 = arith.mulf %32, %32 : f32
    %46 = arith.subf %44, %45 : f32
    %cst_21 = arith.constant 9.99999974E-6 : f32
    %47 = arith.addf %46, %cst_21 : f32
    %48 = vector.extract_strided_slice %26 {offsets = [0, 96], sizes = [1, 32], strides = [1, 1]} : vector<1x160xf32> to vector<1x32xf32>
    %49 = vector.shape_cast %48 : vector<1x32xf32> to vector<1x1x32xf32>
    %cst_22 = arith.constant dense<0.000000e+00> : vector<1xf32>
    %50 = vector.multi_reduction <add>, %49, %cst_22 [1, 2] : vector<1x1x32xf32> to vector<1xf32>
    %51 = vector.shape_cast %50 : vector<1xf32> to vector<1x1x1xf32>
    %52 = vector.extract %51[0, 0, 0] : f32 from vector<1x1x1xf32>
    %cst_23 = arith.constant 0.001953125 : f32
    %53 = arith.mulf %52, %cst_23 : f32
    %54 = arith.mulf %38, %38 : f32
    %55 = arith.subf %53, %54 : f32
    %cst_24 = arith.constant 9.99999974E-6 : f32
    %56 = arith.addf %55, %cst_24 : f32
    %57 = vector.extract_strided_slice %26 {offsets = [0, 128], sizes = [1, 32], strides = [1, 1]} : vector<1x160xf32> to vector<1x32xf32>
    %58 = vector.shape_cast %57 : vector<1x32xf32> to vector<1x1x32xf32>
    %cst_25 = arith.constant dense<0.000000e+00> : vector<1xf32>
    %59 = vector.multi_reduction <add>, %58, %cst_25 [1, 2] : vector<1x1x32xf32> to vector<1xf32>
    %60 = vector.shape_cast %59 : vector<1xf32> to vector<1x1x1xf32>
    %61 = vector.extract %60[0, 0, 0] : f32 from vector<1x1x1xf32>
    %cst_26 = arith.constant 0.001953125 : f32
    %62 = arith.mulf %61, %cst_26 : f32
    %63 = arith.mulf %32, %38 : f32
    %64 = arith.subf %62, %63 : f32
    %65 = arith.mulf %47, %56 : f32
    %66 = arith.mulf %64, %64 : f32
    %67 = arith.subf %65, %66 : f32
    %68 = math.sqrt %67 : f32
    %69 = arith.addf %47, %56 : f32
    %cst_27 = arith.constant 2.000000e+00 : f32
    %70 = arith.mulf %cst_27, %68 : f32
    %71 = arith.addf %69, %70 : f32
    %72 = math.sqrt %71 : f32
    %73 = arith.mulf %68, %72 : f32
    %cst_28 = arith.constant 1.000000e+00 : f32
    %74 = arith.divf %cst_28, %73 : f32
    %75 = arith.addf %56, %68 : f32
    %76 = arith.mulf %75, %74 : f32
    %77 = arith.addf %47, %68 : f32
    %78 = arith.mulf %77, %74 : f32
    %cst_29 = arith.constant 0.000000e+00 : f32
    %79 = arith.subf %cst_29, %64 : f32
    %80 = arith.mulf %79, %74 : f32
    %81 = arith.mulf %0, %76 : f32
    %82 = arith.mulf %2, %80 : f32
    %83 = arith.addf %81, %82 : f32
    %84 = arith.mulf %0, %80 : f32
    %85 = arith.mulf %2, %78 : f32
    %86 = arith.addf %84, %85 : f32
    %87 = arith.mulf %2, %76 : f32
    %88 = arith.mulf %1, %80 : f32
    %89 = arith.addf %87, %88 : f32
    %90 = arith.mulf %2, %80 : f32
    %91 = arith.mulf %1, %78 : f32
    %92 = arith.addf %90, %91 : f32
    %93 = arith.mulf %83, %32 : f32
    %94 = arith.subf %3, %93 : f32
    %95 = arith.mulf %86, %38 : f32
    %96 = arith.subf %94, %95 : f32
    %97 = arith.mulf %89, %32 : f32
    %98 = arith.subf %4, %97 : f32
    %99 = arith.mulf %92, %38 : f32
    %100 = arith.subf %98, %99 : f32
    %101 = vector.broadcast %83 : f32 to vector<16x32xf32>
    %102 = arith.mulf %101, %18 : vector<16x32xf32>
    %103 = vector.broadcast %86 : f32 to vector<16x32xf32>
    %104 = arith.mulf %103, %19 : vector<16x32xf32>
    %105 = arith.addf %102, %104 : vector<16x32xf32>
    %106 = vector.broadcast %96 : f32 to vector<16x32xf32>
    %107 = arith.addf %105, %106 : vector<16x32xf32>
    %108 = vector.broadcast %89 : f32 to vector<16x32xf32>
    %109 = arith.mulf %108, %18 : vector<16x32xf32>
    %110 = vector.broadcast %92 : f32 to vector<16x32xf32>
    %111 = arith.mulf %110, %19 : vector<16x32xf32>
    %112 = arith.addf %109, %111 : vector<16x32xf32>
    %113 = vector.broadcast %100 : f32 to vector<16x32xf32>
    %114 = arith.addf %112, %113 : vector<16x32xf32>
    %115 = arith.mulf %20, %20 : vector<16x32xf32>
    %116 = arith.mulf %21, %21 : vector<16x32xf32>
    %117 = arith.mulf %20, %21 : vector<16x32xf32>
    %118 = tpu.concatenate %20, %21, %115, %116, %117 in 1 : vector<16x32xf32>, vector<16x32xf32>, vector<16x32xf32>, vector<16x32xf32>, vector<16x32xf32> -> vector<16x160xf32>
    %cst_30 = arith.constant dense<0.000000e+00> : vector<1x160xf32>
    %119 = tpu.matmul %17, %118, %cst_30 {dimension_numbers = #tpu.dot_dimension_numbers<[1], [0], [0], [1], [0, 0, 1, 1], [], []>} : vector<1x16xf32>, vector<16x160xf32>, vector<1x160xf32> -> vector<1x160xf32>
    %120 = vector.extract_strided_slice %119 {offsets = [0, 0], sizes = [1, 32], strides = [1, 1]} : vector<1x160xf32> to vector<1x32xf32>
    %121 = vector.shape_cast %120 : vector<1x32xf32> to vector<1x1x32xf32>
    %cst_31 = arith.constant dense<0.000000e+00> : vector<1xf32>
    %122 = vector.multi_reduction <add>, %121, %cst_31 [1, 2] : vector<1x1x32xf32> to vector<1xf32>
    %123 = vector.shape_cast %122 : vector<1xf32> to vector<1x1x1xf32>
    %124 = vector.extract %123[0, 0, 0] : f32 from vector<1x1x1xf32>
    %cst_32 = arith.constant 0.001953125 : f32
    %125 = arith.mulf %124, %cst_32 : f32
    %126 = vector.extract_strided_slice %119 {offsets = [0, 32], sizes = [1, 32], strides = [1, 1]} : vector<1x160xf32> to vector<1x32xf32>
    %127 = vector.shape_cast %126 : vector<1x32xf32> to vector<1x1x32xf32>
    %cst_33 = arith.constant dense<0.000000e+00> : vector<1xf32>
    %128 = vector.multi_reduction <add>, %127, %cst_33 [1, 2] : vector<1x1x32xf32> to vector<1xf32>
    %129 = vector.shape_cast %128 : vector<1xf32> to vector<1x1x1xf32>
    %130 = vector.extract %129[0, 0, 0] : f32 from vector<1x1x1xf32>
    %cst_34 = arith.constant 0.001953125 : f32
    %131 = arith.mulf %130, %cst_34 : f32
    %132 = vector.extract_strided_slice %119 {offsets = [0, 64], sizes = [1, 32], strides = [1, 1]} : vector<1x160xf32> to vector<1x32xf32>
    %133 = vector.shape_cast %132 : vector<1x32xf32> to vector<1x1x32xf32>
    %cst_35 = arith.constant dense<0.000000e+00> : vector<1xf32>
    %134 = vector.multi_reduction <add>, %133, %cst_35 [1, 2] : vector<1x1x32xf32> to vector<1xf32>
    %135 = vector.shape_cast %134 : vector<1xf32> to vector<1x1x1xf32>
    %136 = vector.extract %135[0, 0, 0] : f32 from vector<1x1x1xf32>
    %cst_36 = arith.constant 0.001953125 : f32
    %137 = arith.mulf %136, %cst_36 : f32
    %138 = arith.mulf %125, %125 : f32
    %139 = arith.subf %137, %138 : f32
    %cst_37 = arith.constant 9.99999974E-6 : f32
    %140 = arith.addf %139, %cst_37 : f32
    %141 = vector.extract_strided_slice %119 {offsets = [0, 96], sizes = [1, 32], strides = [1, 1]} : vector<1x160xf32> to vector<1x32xf32>
    %142 = vector.shape_cast %141 : vector<1x32xf32> to vector<1x1x32xf32>
    %cst_38 = arith.constant dense<0.000000e+00> : vector<1xf32>
    %143 = vector.multi_reduction <add>, %142, %cst_38 [1, 2] : vector<1x1x32xf32> to vector<1xf32>
    %144 = vector.shape_cast %143 : vector<1xf32> to vector<1x1x1xf32>
    %145 = vector.extract %144[0, 0, 0] : f32 from vector<1x1x1xf32>
    %cst_39 = arith.constant 0.001953125 : f32
    %146 = arith.mulf %145, %cst_39 : f32
    %147 = arith.mulf %131, %131 : f32
    %148 = arith.subf %146, %147 : f32
    %cst_40 = arith.constant 9.99999974E-6 : f32
    %149 = arith.addf %148, %cst_40 : f32
    %150 = vector.extract_strided_slice %119 {offsets = [0, 128], sizes = [1, 32], strides = [1, 1]} : vector<1x160xf32> to vector<1x32xf32>
    %151 = vector.shape_cast %150 : vector<1x32xf32> to vector<1x1x32xf32>
    %cst_41 = arith.constant dense<0.000000e+00> : vector<1xf32>
    %152 = vector.multi_reduction <add>, %151, %cst_41 [1, 2] : vector<1x1x32xf32> to vector<1xf32>
    %153 = vector.shape_cast %152 : vector<1xf32> to vector<1x1x1xf32>
    %154 = vector.extract %153[0, 0, 0] : f32 from vector<1x1x1xf32>
    %cst_42 = arith.constant 0.001953125 : f32
    %155 = arith.mulf %154, %cst_42 : f32
    %156 = arith.mulf %125, %131 : f32
    %157 = arith.subf %155, %156 : f32
    %158 = arith.mulf %140, %149 : f32
    %159 = arith.mulf %157, %157 : f32
    %160 = arith.subf %158, %159 : f32
    %161 = math.sqrt %160 : f32
    %162 = arith.addf %140, %149 : f32
    %cst_43 = arith.constant 2.000000e+00 : f32
    %163 = arith.mulf %cst_43, %161 : f32
    %164 = arith.addf %162, %163 : f32
    %165 = math.sqrt %164 : f32
    %166 = arith.mulf %161, %165 : f32
    %cst_44 = arith.constant 1.000000e+00 : f32
    %167 = arith.divf %cst_44, %166 : f32
    %168 = arith.addf %149, %161 : f32
    %169 = arith.mulf %168, %167 : f32
    %170 = arith.addf %140, %161 : f32
    %171 = arith.mulf %170, %167 : f32
    %cst_45 = arith.constant 0.000000e+00 : f32
    %172 = arith.subf %cst_45, %157 : f32
    %173 = arith.mulf %172, %167 : f32
    %174 = arith.mulf %0, %169 : f32
    %175 = arith.mulf %2, %173 : f32
    %176 = arith.addf %174, %175 : f32
    %177 = arith.mulf %0, %173 : f32
    %178 = arith.mulf %2, %171 : f32
    %179 = arith.addf %177, %178 : f32
    %180 = arith.mulf %2, %169 : f32
    %181 = arith.mulf %1, %173 : f32
    %182 = arith.addf %180, %181 : f32
    %183 = arith.mulf %2, %173 : f32
    %184 = arith.mulf %1, %171 : f32
    %185 = arith.addf %183, %184 : f32
    %186 = arith.mulf %176, %125 : f32
    %187 = arith.subf %3, %186 : f32
    %188 = arith.mulf %179, %131 : f32
    %189 = arith.subf %187, %188 : f32
    %190 = arith.mulf %182, %125 : f32
    %191 = arith.subf %4, %190 : f32
    %192 = arith.mulf %185, %131 : f32
    %193 = arith.subf %191, %192 : f32
    %194 = vector.broadcast %176 : f32 to vector<16x32xf32>
    %195 = arith.mulf %194, %20 : vector<16x32xf32>
    %196 = vector.broadcast %179 : f32 to vector<16x32xf32>
    %197 = arith.mulf %196, %21 : vector<16x32xf32>
    %198 = arith.addf %195, %197 : vector<16x32xf32>
    %199 = vector.broadcast %189 : f32 to vector<16x32xf32>
    %200 = arith.addf %198, %199 : vector<16x32xf32>
    %201 = vector.broadcast %182 : f32 to vector<16x32xf32>
    %202 = arith.mulf %201, %20 : vector<16x32xf32>
    %203 = vector.broadcast %185 : f32 to vector<16x32xf32>
    %204 = arith.mulf %203, %21 : vector<16x32xf32>
    %205 = arith.addf %202, %204 : vector<16x32xf32>
    %206 = vector.broadcast %193 : f32 to vector<16x32xf32>
    %207 = arith.addf %205, %206 : vector<16x32xf32>
    %208 = arith.addf %107, %200 : vector<16x32xf32>
    %cst_46 = arith.constant 5.000000e-01 : f32
    %209 = vector.broadcast %cst_46 : f32 to vector<16x32xf32>
    %210 = arith.mulf %209, %208 : vector<16x32xf32>
    %211 = math.tanh %210 : vector<16x32xf32>
    %cst_47 = arith.constant 1.000000e+00 : f32
    %212 = vector.broadcast %cst_47 : f32 to vector<16x32xf32>
    %213 = arith.addf %211, %212 : vector<16x32xf32>
    %cst_48 = arith.constant 5.000000e-01 : f32
    %214 = vector.broadcast %cst_48 : f32 to vector<16x32xf32>
    %215 = arith.mulf %214, %213 : vector<16x32xf32>
    %216 = arith.addf %114, %207 : vector<16x32xf32>
    %cst_49 = arith.constant 5.000000e-01 : f32
    %217 = vector.broadcast %cst_49 : f32 to vector<16x32xf32>
    %218 = arith.mulf %217, %216 : vector<16x32xf32>
    %219 = math.tanh %218 : vector<16x32xf32>
    %cst_50 = arith.constant 1.000000e+00 : f32
    %220 = vector.broadcast %cst_50 : f32 to vector<16x32xf32>
    %221 = arith.addf %219, %220 : vector<16x32xf32>
    %cst_51 = arith.constant 5.000000e-01 : f32
    %222 = vector.broadcast %cst_51 : f32 to vector<16x32xf32>
    %223 = arith.mulf %222, %221 : vector<16x32xf32>
    %224 = vector.extract_strided_slice %10 {offsets = [0, 64], sizes = [16, 32], strides = [1, 1]} : vector<16x192xf32> to vector<16x32xf32>
    %225 = vector.extract_strided_slice %10 {offsets = [0, 96], sizes = [16, 32], strides = [1, 1]} : vector<16x192xf32> to vector<16x32xf32>
    %226 = vector.extract_strided_slice %16 {offsets = [0, 64], sizes = [16, 32], strides = [1, 1]} : vector<16x192xf32> to vector<16x32xf32>
    %227 = vector.extract_strided_slice %16 {offsets = [0, 96], sizes = [16, 32], strides = [1, 1]} : vector<16x192xf32> to vector<16x32xf32>
    %228 = arith.mulf %226, %226 : vector<16x32xf32>
    %229 = arith.mulf %227, %227 : vector<16x32xf32>
    %230 = arith.mulf %226, %227 : vector<16x32xf32>
    %231 = tpu.concatenate %226, %227, %228, %229, %230 in 1 : vector<16x32xf32>, vector<16x32xf32>, vector<16x32xf32>, vector<16x32xf32>, vector<16x32xf32> -> vector<16x160xf32>
    %cst_52 = arith.constant dense<0.000000e+00> : vector<1x160xf32>
    %232 = tpu.matmul %17, %231, %cst_52 {dimension_numbers = #tpu.dot_dimension_numbers<[1], [0], [0], [1], [0, 0, 1, 1], [], []>} : vector<1x16xf32>, vector<16x160xf32>, vector<1x160xf32> -> vector<1x160xf32>
    %233 = vector.extract_strided_slice %232 {offsets = [0, 0], sizes = [1, 32], strides = [1, 1]} : vector<1x160xf32> to vector<1x32xf32>
    %234 = vector.shape_cast %233 : vector<1x32xf32> to vector<1x1x32xf32>
    %cst_53 = arith.constant dense<0.000000e+00> : vector<1xf32>
    %235 = vector.multi_reduction <add>, %234, %cst_53 [1, 2] : vector<1x1x32xf32> to vector<1xf32>
    %236 = vector.shape_cast %235 : vector<1xf32> to vector<1x1x1xf32>
    %237 = vector.extract %236[0, 0, 0] : f32 from vector<1x1x1xf32>
    %cst_54 = arith.constant 0.001953125 : f32
    %238 = arith.mulf %237, %cst_54 : f32
    %239 = vector.extract_strided_slice %232 {offsets = [0, 32], sizes = [1, 32], strides = [1, 1]} : vector<1x160xf32> to vector<1x32xf32>
    %240 = vector.shape_cast %239 : vector<1x32xf32> to vector<1x1x32xf32>
    %cst_55 = arith.constant dense<0.000000e+00> : vector<1xf32>
    %241 = vector.multi_reduction <add>, %240, %cst_55 [1, 2] : vector<1x1x32xf32> to vector<1xf32>
    %242 = vector.shape_cast %241 : vector<1xf32> to vector<1x1x1xf32>
    %243 = vector.extract %242[0, 0, 0] : f32 from vector<1x1x1xf32>
    %cst_56 = arith.constant 0.001953125 : f32
    %244 = arith.mulf %243, %cst_56 : f32
    %245 = vector.extract_strided_slice %232 {offsets = [0, 64], sizes = [1, 32], strides = [1, 1]} : vector<1x160xf32> to vector<1x32xf32>
    %246 = vector.shape_cast %245 : vector<1x32xf32> to vector<1x1x32xf32>
    %cst_57 = arith.constant dense<0.000000e+00> : vector<1xf32>
    %247 = vector.multi_reduction <add>, %246, %cst_57 [1, 2] : vector<1x1x32xf32> to vector<1xf32>
    %248 = vector.shape_cast %247 : vector<1xf32> to vector<1x1x1xf32>
    %249 = vector.extract %248[0, 0, 0] : f32 from vector<1x1x1xf32>
    %cst_58 = arith.constant 0.001953125 : f32
    %250 = arith.mulf %249, %cst_58 : f32
    %251 = arith.mulf %238, %238 : f32
    %252 = arith.subf %250, %251 : f32
    %cst_59 = arith.constant 9.99999974E-6 : f32
    %253 = arith.addf %252, %cst_59 : f32
    %254 = vector.extract_strided_slice %232 {offsets = [0, 96], sizes = [1, 32], strides = [1, 1]} : vector<1x160xf32> to vector<1x32xf32>
    %255 = vector.shape_cast %254 : vector<1x32xf32> to vector<1x1x32xf32>
    %cst_60 = arith.constant dense<0.000000e+00> : vector<1xf32>
    %256 = vector.multi_reduction <add>, %255, %cst_60 [1, 2] : vector<1x1x32xf32> to vector<1xf32>
    %257 = vector.shape_cast %256 : vector<1xf32> to vector<1x1x1xf32>
    %258 = vector.extract %257[0, 0, 0] : f32 from vector<1x1x1xf32>
    %cst_61 = arith.constant 0.001953125 : f32
    %259 = arith.mulf %258, %cst_61 : f32
    %260 = arith.mulf %244, %244 : f32
    %261 = arith.subf %259, %260 : f32
    %cst_62 = arith.constant 9.99999974E-6 : f32
    %262 = arith.addf %261, %cst_62 : f32
    %263 = vector.extract_strided_slice %232 {offsets = [0, 128], sizes = [1, 32], strides = [1, 1]} : vector<1x160xf32> to vector<1x32xf32>
    %264 = vector.shape_cast %263 : vector<1x32xf32> to vector<1x1x32xf32>
    %cst_63 = arith.constant dense<0.000000e+00> : vector<1xf32>
    %265 = vector.multi_reduction <add>, %264, %cst_63 [1, 2] : vector<1x1x32xf32> to vector<1xf32>
    %266 = vector.shape_cast %265 : vector<1xf32> to vector<1x1x1xf32>
    %267 = vector.extract %266[0, 0, 0] : f32 from vector<1x1x1xf32>
    %cst_64 = arith.constant 0.001953125 : f32
    %268 = arith.mulf %267, %cst_64 : f32
    %269 = arith.mulf %238, %244 : f32
    %270 = arith.subf %268, %269 : f32
    %271 = arith.mulf %253, %262 : f32
    %272 = arith.mulf %270, %270 : f32
    %273 = arith.subf %271, %272 : f32
    %274 = math.sqrt %273 : f32
    %275 = arith.addf %253, %262 : f32
    %cst_65 = arith.constant 2.000000e+00 : f32
    %276 = arith.mulf %cst_65, %274 : f32
    %277 = arith.addf %275, %276 : f32
    %278 = math.sqrt %277 : f32
    %279 = arith.mulf %274, %278 : f32
    %cst_66 = arith.constant 1.000000e+00 : f32
    %280 = arith.divf %cst_66, %279 : f32
    %281 = arith.addf %262, %274 : f32
    %282 = arith.mulf %281, %280 : f32
    %283 = arith.addf %253, %274 : f32
    %284 = arith.mulf %283, %280 : f32
    %cst_67 = arith.constant 0.000000e+00 : f32
    %285 = arith.subf %cst_67, %270 : f32
    %286 = arith.mulf %285, %280 : f32
    %287 = arith.mulf %0, %282 : f32
    %288 = arith.mulf %2, %286 : f32
    %289 = arith.addf %287, %288 : f32
    %290 = arith.mulf %0, %286 : f32
    %291 = arith.mulf %2, %284 : f32
    %292 = arith.addf %290, %291 : f32
    %293 = arith.mulf %2, %282 : f32
    %294 = arith.mulf %1, %286 : f32
    %295 = arith.addf %293, %294 : f32
    %296 = arith.mulf %2, %286 : f32
    %297 = arith.mulf %1, %284 : f32
    %298 = arith.addf %296, %297 : f32
    %299 = arith.mulf %289, %238 : f32
    %300 = arith.subf %3, %299 : f32
    %301 = arith.mulf %292, %244 : f32
    %302 = arith.subf %300, %301 : f32
    %303 = arith.mulf %295, %238 : f32
    %304 = arith.subf %4, %303 : f32
    %305 = arith.mulf %298, %244 : f32
    %306 = arith.subf %304, %305 : f32
    %307 = vector.broadcast %289 : f32 to vector<16x32xf32>
    %308 = arith.mulf %307, %226 : vector<16x32xf32>
    %309 = vector.broadcast %292 : f32 to vector<16x32xf32>
    %310 = arith.mulf %309, %227 : vector<16x32xf32>
    %311 = arith.addf %308, %310 : vector<16x32xf32>
    %312 = vector.broadcast %302 : f32 to vector<16x32xf32>
    %313 = arith.addf %311, %312 : vector<16x32xf32>
    %314 = vector.broadcast %295 : f32 to vector<16x32xf32>
    %315 = arith.mulf %314, %226 : vector<16x32xf32>
    %316 = vector.broadcast %298 : f32 to vector<16x32xf32>
    %317 = arith.mulf %316, %227 : vector<16x32xf32>
    %318 = arith.addf %315, %317 : vector<16x32xf32>
    %319 = vector.broadcast %306 : f32 to vector<16x32xf32>
    %320 = arith.addf %318, %319 : vector<16x32xf32>
    %321 = arith.mulf %224, %224 : vector<16x32xf32>
    %322 = arith.mulf %225, %225 : vector<16x32xf32>
    %323 = arith.mulf %224, %225 : vector<16x32xf32>
    %324 = tpu.concatenate %224, %225, %321, %322, %323 in 1 : vector<16x32xf32>, vector<16x32xf32>, vector<16x32xf32>, vector<16x32xf32>, vector<16x32xf32> -> vector<16x160xf32>
    %cst_68 = arith.constant dense<0.000000e+00> : vector<1x160xf32>
    %325 = tpu.matmul %17, %324, %cst_68 {dimension_numbers = #tpu.dot_dimension_numbers<[1], [0], [0], [1], [0, 0, 1, 1], [], []>} : vector<1x16xf32>, vector<16x160xf32>, vector<1x160xf32> -> vector<1x160xf32>
    %326 = vector.extract_strided_slice %325 {offsets = [0, 0], sizes = [1, 32], strides = [1, 1]} : vector<1x160xf32> to vector<1x32xf32>
    %327 = vector.shape_cast %326 : vector<1x32xf32> to vector<1x1x32xf32>
    %cst_69 = arith.constant dense<0.000000e+00> : vector<1xf32>
    %328 = vector.multi_reduction <add>, %327, %cst_69 [1, 2] : vector<1x1x32xf32> to vector<1xf32>
    %329 = vector.shape_cast %328 : vector<1xf32> to vector<1x1x1xf32>
    %330 = vector.extract %329[0, 0, 0] : f32 from vector<1x1x1xf32>
    %cst_70 = arith.constant 0.001953125 : f32
    %331 = arith.mulf %330, %cst_70 : f32
    %332 = vector.extract_strided_slice %325 {offsets = [0, 32], sizes = [1, 32], strides = [1, 1]} : vector<1x160xf32> to vector<1x32xf32>
    %333 = vector.shape_cast %332 : vector<1x32xf32> to vector<1x1x32xf32>
    %cst_71 = arith.constant dense<0.000000e+00> : vector<1xf32>
    %334 = vector.multi_reduction <add>, %333, %cst_71 [1, 2] : vector<1x1x32xf32> to vector<1xf32>
    %335 = vector.shape_cast %334 : vector<1xf32> to vector<1x1x1xf32>
    %336 = vector.extract %335[0, 0, 0] : f32 from vector<1x1x1xf32>
    %cst_72 = arith.constant 0.001953125 : f32
    %337 = arith.mulf %336, %cst_72 : f32
    %338 = vector.extract_strided_slice %325 {offsets = [0, 64], sizes = [1, 32], strides = [1, 1]} : vector<1x160xf32> to vector<1x32xf32>
    %339 = vector.shape_cast %338 : vector<1x32xf32> to vector<1x1x32xf32>
    %cst_73 = arith.constant dense<0.000000e+00> : vector<1xf32>
    %340 = vector.multi_reduction <add>, %339, %cst_73 [1, 2] : vector<1x1x32xf32> to vector<1xf32>
    %341 = vector.shape_cast %340 : vector<1xf32> to vector<1x1x1xf32>
    %342 = vector.extract %341[0, 0, 0] : f32 from vector<1x1x1xf32>
    %cst_74 = arith.constant 0.001953125 : f32
    %343 = arith.mulf %342, %cst_74 : f32
    %344 = arith.mulf %331, %331 : f32
    %345 = arith.subf %343, %344 : f32
    %cst_75 = arith.constant 9.99999974E-6 : f32
    %346 = arith.addf %345, %cst_75 : f32
    %347 = vector.extract_strided_slice %325 {offsets = [0, 96], sizes = [1, 32], strides = [1, 1]} : vector<1x160xf32> to vector<1x32xf32>
    %348 = vector.shape_cast %347 : vector<1x32xf32> to vector<1x1x32xf32>
    %cst_76 = arith.constant dense<0.000000e+00> : vector<1xf32>
    %349 = vector.multi_reduction <add>, %348, %cst_76 [1, 2] : vector<1x1x32xf32> to vector<1xf32>
    %350 = vector.shape_cast %349 : vector<1xf32> to vector<1x1x1xf32>
    %351 = vector.extract %350[0, 0, 0] : f32 from vector<1x1x1xf32>
    %cst_77 = arith.constant 0.001953125 : f32
    %352 = arith.mulf %351, %cst_77 : f32
    %353 = arith.mulf %337, %337 : f32
    %354 = arith.subf %352, %353 : f32
    %cst_78 = arith.constant 9.99999974E-6 : f32
    %355 = arith.addf %354, %cst_78 : f32
    %356 = vector.extract_strided_slice %325 {offsets = [0, 128], sizes = [1, 32], strides = [1, 1]} : vector<1x160xf32> to vector<1x32xf32>
    %357 = vector.shape_cast %356 : vector<1x32xf32> to vector<1x1x32xf32>
    %cst_79 = arith.constant dense<0.000000e+00> : vector<1xf32>
    %358 = vector.multi_reduction <add>, %357, %cst_79 [1, 2] : vector<1x1x32xf32> to vector<1xf32>
    %359 = vector.shape_cast %358 : vector<1xf32> to vector<1x1x1xf32>
    %360 = vector.extract %359[0, 0, 0] : f32 from vector<1x1x1xf32>
    %cst_80 = arith.constant 0.001953125 : f32
    %361 = arith.mulf %360, %cst_80 : f32
    %362 = arith.mulf %331, %337 : f32
    %363 = arith.subf %361, %362 : f32
    %364 = arith.mulf %346, %355 : f32
    %365 = arith.mulf %363, %363 : f32
    %366 = arith.subf %364, %365 : f32
    %367 = math.sqrt %366 : f32
    %368 = arith.addf %346, %355 : f32
    %cst_81 = arith.constant 2.000000e+00 : f32
    %369 = arith.mulf %cst_81, %367 : f32
    %370 = arith.addf %368, %369 : f32
    %371 = math.sqrt %370 : f32
    %372 = arith.mulf %367, %371 : f32
    %cst_82 = arith.constant 1.000000e+00 : f32
    %373 = arith.divf %cst_82, %372 : f32
    %374 = arith.addf %355, %367 : f32
    %375 = arith.mulf %374, %373 : f32
    %376 = arith.addf %346, %367 : f32
    %377 = arith.mulf %376, %373 : f32
    %cst_83 = arith.constant 0.000000e+00 : f32
    %378 = arith.subf %cst_83, %363 : f32
    %379 = arith.mulf %378, %373 : f32
    %380 = arith.mulf %0, %375 : f32
    %381 = arith.mulf %2, %379 : f32
    %382 = arith.addf %380, %381 : f32
    %383 = arith.mulf %0, %379 : f32
    %384 = arith.mulf %2, %377 : f32
    %385 = arith.addf %383, %384 : f32
    %386 = arith.mulf %2, %375 : f32
    %387 = arith.mulf %1, %379 : f32
    %388 = arith.addf %386, %387 : f32
    %389 = arith.mulf %2, %379 : f32
    %390 = arith.mulf %1, %377 : f32
    %391 = arith.addf %389, %390 : f32
    %392 = arith.mulf %382, %331 : f32
    %393 = arith.subf %3, %392 : f32
    %394 = arith.mulf %385, %337 : f32
    %395 = arith.subf %393, %394 : f32
    %396 = arith.mulf %388, %331 : f32
    %397 = arith.subf %4, %396 : f32
    %398 = arith.mulf %391, %337 : f32
    %399 = arith.subf %397, %398 : f32
    %400 = vector.broadcast %382 : f32 to vector<16x32xf32>
    %401 = arith.mulf %400, %224 : vector<16x32xf32>
    %402 = vector.broadcast %385 : f32 to vector<16x32xf32>
    %403 = arith.mulf %402, %225 : vector<16x32xf32>
    %404 = arith.addf %401, %403 : vector<16x32xf32>
    %405 = vector.broadcast %395 : f32 to vector<16x32xf32>
    %406 = arith.addf %404, %405 : vector<16x32xf32>
    %407 = vector.broadcast %388 : f32 to vector<16x32xf32>
    %408 = arith.mulf %407, %224 : vector<16x32xf32>
    %409 = vector.broadcast %391 : f32 to vector<16x32xf32>
    %410 = arith.mulf %409, %225 : vector<16x32xf32>
    %411 = arith.addf %408, %410 : vector<16x32xf32>
    %412 = vector.broadcast %399 : f32 to vector<16x32xf32>
    %413 = arith.addf %411, %412 : vector<16x32xf32>
    %414 = arith.addf %313, %406 : vector<16x32xf32>
    %cst_84 = arith.constant 5.000000e-01 : f32
    %415 = vector.broadcast %cst_84 : f32 to vector<16x32xf32>
    %416 = arith.mulf %415, %414 : vector<16x32xf32>
    %417 = math.tanh %416 : vector<16x32xf32>
    %cst_85 = arith.constant 1.000000e+00 : f32
    %418 = vector.broadcast %cst_85 : f32 to vector<16x32xf32>
    %419 = arith.addf %417, %418 : vector<16x32xf32>
    %cst_86 = arith.constant 5.000000e-01 : f32
    %420 = vector.broadcast %cst_86 : f32 to vector<16x32xf32>
    %421 = arith.mulf %420, %419 : vector<16x32xf32>
    %422 = arith.addf %320, %413 : vector<16x32xf32>
    %cst_87 = arith.constant 5.000000e-01 : f32
    %423 = vector.broadcast %cst_87 : f32 to vector<16x32xf32>
    %424 = arith.mulf %423, %422 : vector<16x32xf32>
    %425 = math.tanh %424 : vector<16x32xf32>
    %cst_88 = arith.constant 1.000000e+00 : f32
    %426 = vector.broadcast %cst_88 : f32 to vector<16x32xf32>
    %427 = arith.addf %425, %426 : vector<16x32xf32>
    %cst_89 = arith.constant 5.000000e-01 : f32
    %428 = vector.broadcast %cst_89 : f32 to vector<16x32xf32>
    %429 = arith.mulf %428, %427 : vector<16x32xf32>
    %430 = vector.extract_strided_slice %10 {offsets = [0, 128], sizes = [16, 32], strides = [1, 1]} : vector<16x192xf32> to vector<16x32xf32>
    %431 = vector.extract_strided_slice %10 {offsets = [0, 160], sizes = [16, 32], strides = [1, 1]} : vector<16x192xf32> to vector<16x32xf32>
    %432 = vector.extract_strided_slice %16 {offsets = [0, 128], sizes = [16, 32], strides = [1, 1]} : vector<16x192xf32> to vector<16x32xf32>
    %433 = vector.extract_strided_slice %16 {offsets = [0, 160], sizes = [16, 32], strides = [1, 1]} : vector<16x192xf32> to vector<16x32xf32>
    %434 = arith.mulf %432, %432 : vector<16x32xf32>
    %435 = arith.mulf %433, %433 : vector<16x32xf32>
    %436 = arith.mulf %432, %433 : vector<16x32xf32>
    %437 = tpu.concatenate %432, %433, %434, %435, %436 in 1 : vector<16x32xf32>, vector<16x32xf32>, vector<16x32xf32>, vector<16x32xf32>, vector<16x32xf32> -> vector<16x160xf32>
    %cst_90 = arith.constant dense<0.000000e+00> : vector<1x160xf32>
    %438 = tpu.matmul %17, %437, %cst_90 {dimension_numbers = #tpu.dot_dimension_numbers<[1], [0], [0], [1], [0, 0, 1, 1], [], []>} : vector<1x16xf32>, vector<16x160xf32>, vector<1x160xf32> -> vector<1x160xf32>
    %439 = vector.extract_strided_slice %438 {offsets = [0, 0], sizes = [1, 32], strides = [1, 1]} : vector<1x160xf32> to vector<1x32xf32>
    %440 = vector.shape_cast %439 : vector<1x32xf32> to vector<1x1x32xf32>
    %cst_91 = arith.constant dense<0.000000e+00> : vector<1xf32>
    %441 = vector.multi_reduction <add>, %440, %cst_91 [1, 2] : vector<1x1x32xf32> to vector<1xf32>
    %442 = vector.shape_cast %441 : vector<1xf32> to vector<1x1x1xf32>
    %443 = vector.extract %442[0, 0, 0] : f32 from vector<1x1x1xf32>
    %cst_92 = arith.constant 0.001953125 : f32
    %444 = arith.mulf %443, %cst_92 : f32
    %445 = vector.extract_strided_slice %438 {offsets = [0, 32], sizes = [1, 32], strides = [1, 1]} : vector<1x160xf32> to vector<1x32xf32>
    %446 = vector.shape_cast %445 : vector<1x32xf32> to vector<1x1x32xf32>
    %cst_93 = arith.constant dense<0.000000e+00> : vector<1xf32>
    %447 = vector.multi_reduction <add>, %446, %cst_93 [1, 2] : vector<1x1x32xf32> to vector<1xf32>
    %448 = vector.shape_cast %447 : vector<1xf32> to vector<1x1x1xf32>
    %449 = vector.extract %448[0, 0, 0] : f32 from vector<1x1x1xf32>
    %cst_94 = arith.constant 0.001953125 : f32
    %450 = arith.mulf %449, %cst_94 : f32
    %451 = vector.extract_strided_slice %438 {offsets = [0, 64], sizes = [1, 32], strides = [1, 1]} : vector<1x160xf32> to vector<1x32xf32>
    %452 = vector.shape_cast %451 : vector<1x32xf32> to vector<1x1x32xf32>
    %cst_95 = arith.constant dense<0.000000e+00> : vector<1xf32>
    %453 = vector.multi_reduction <add>, %452, %cst_95 [1, 2] : vector<1x1x32xf32> to vector<1xf32>
    %454 = vector.shape_cast %453 : vector<1xf32> to vector<1x1x1xf32>
    %455 = vector.extract %454[0, 0, 0] : f32 from vector<1x1x1xf32>
    %cst_96 = arith.constant 0.001953125 : f32
    %456 = arith.mulf %455, %cst_96 : f32
    %457 = arith.mulf %444, %444 : f32
    %458 = arith.subf %456, %457 : f32
    %cst_97 = arith.constant 9.99999974E-6 : f32
    %459 = arith.addf %458, %cst_97 : f32
    %460 = vector.extract_strided_slice %438 {offsets = [0, 96], sizes = [1, 32], strides = [1, 1]} : vector<1x160xf32> to vector<1x32xf32>
    %461 = vector.shape_cast %460 : vector<1x32xf32> to vector<1x1x32xf32>
    %cst_98 = arith.constant dense<0.000000e+00> : vector<1xf32>
    %462 = vector.multi_reduction <add>, %461, %cst_98 [1, 2] : vector<1x1x32xf32> to vector<1xf32>
    %463 = vector.shape_cast %462 : vector<1xf32> to vector<1x1x1xf32>
    %464 = vector.extract %463[0, 0, 0] : f32 from vector<1x1x1xf32>
    %cst_99 = arith.constant 0.001953125 : f32
    %465 = arith.mulf %464, %cst_99 : f32
    %466 = arith.mulf %450, %450 : f32
    %467 = arith.subf %465, %466 : f32
    %cst_100 = arith.constant 9.99999974E-6 : f32
    %468 = arith.addf %467, %cst_100 : f32
    %469 = vector.extract_strided_slice %438 {offsets = [0, 128], sizes = [1, 32], strides = [1, 1]} : vector<1x160xf32> to vector<1x32xf32>
    %470 = vector.shape_cast %469 : vector<1x32xf32> to vector<1x1x32xf32>
    %cst_101 = arith.constant dense<0.000000e+00> : vector<1xf32>
    %471 = vector.multi_reduction <add>, %470, %cst_101 [1, 2] : vector<1x1x32xf32> to vector<1xf32>
    %472 = vector.shape_cast %471 : vector<1xf32> to vector<1x1x1xf32>
    %473 = vector.extract %472[0, 0, 0] : f32 from vector<1x1x1xf32>
    %cst_102 = arith.constant 0.001953125 : f32
    %474 = arith.mulf %473, %cst_102 : f32
    %475 = arith.mulf %444, %450 : f32
    %476 = arith.subf %474, %475 : f32
    %477 = arith.mulf %459, %468 : f32
    %478 = arith.mulf %476, %476 : f32
    %479 = arith.subf %477, %478 : f32
    %480 = math.sqrt %479 : f32
    %481 = arith.addf %459, %468 : f32
    %cst_103 = arith.constant 2.000000e+00 : f32
    %482 = arith.mulf %cst_103, %480 : f32
    %483 = arith.addf %481, %482 : f32
    %484 = math.sqrt %483 : f32
    %485 = arith.mulf %480, %484 : f32
    %cst_104 = arith.constant 1.000000e+00 : f32
    %486 = arith.divf %cst_104, %485 : f32
    %487 = arith.addf %468, %480 : f32
    %488 = arith.mulf %487, %486 : f32
    %489 = arith.addf %459, %480 : f32
    %490 = arith.mulf %489, %486 : f32
    %cst_105 = arith.constant 0.000000e+00 : f32
    %491 = arith.subf %cst_105, %476 : f32
    %492 = arith.mulf %491, %486 : f32
    %493 = arith.mulf %0, %488 : f32
    %494 = arith.mulf %2, %492 : f32
    %495 = arith.addf %493, %494 : f32
    %496 = arith.mulf %0, %492 : f32
    %497 = arith.mulf %2, %490 : f32
    %498 = arith.addf %496, %497 : f32
    %499 = arith.mulf %2, %488 : f32
    %500 = arith.mulf %1, %492 : f32
    %501 = arith.addf %499, %500 : f32
    %502 = arith.mulf %2, %492 : f32
    %503 = arith.mulf %1, %490 : f32
    %504 = arith.addf %502, %503 : f32
    %505 = arith.mulf %495, %444 : f32
    %506 = arith.subf %3, %505 : f32
    %507 = arith.mulf %498, %450 : f32
    %508 = arith.subf %506, %507 : f32
    %509 = arith.mulf %501, %444 : f32
    %510 = arith.subf %4, %509 : f32
    %511 = arith.mulf %504, %450 : f32
    %512 = arith.subf %510, %511 : f32
    %513 = vector.broadcast %495 : f32 to vector<16x32xf32>
    %514 = arith.mulf %513, %432 : vector<16x32xf32>
    %515 = vector.broadcast %498 : f32 to vector<16x32xf32>
    %516 = arith.mulf %515, %433 : vector<16x32xf32>
    %517 = arith.addf %514, %516 : vector<16x32xf32>
    %518 = vector.broadcast %508 : f32 to vector<16x32xf32>
    %519 = arith.addf %517, %518 : vector<16x32xf32>
    %520 = vector.broadcast %501 : f32 to vector<16x32xf32>
    %521 = arith.mulf %520, %432 : vector<16x32xf32>
    %522 = vector.broadcast %504 : f32 to vector<16x32xf32>
    %523 = arith.mulf %522, %433 : vector<16x32xf32>
    %524 = arith.addf %521, %523 : vector<16x32xf32>
    %525 = vector.broadcast %512 : f32 to vector<16x32xf32>
    %526 = arith.addf %524, %525 : vector<16x32xf32>
    %527 = arith.mulf %215, %519 : vector<16x32xf32>
    %528 = arith.mulf %223, %526 : vector<16x32xf32>
    %529 = arith.subf %527, %528 : vector<16x32xf32>
    %530 = arith.mulf %215, %526 : vector<16x32xf32>
    %531 = arith.mulf %223, %519 : vector<16x32xf32>
    %532 = arith.addf %530, %531 : vector<16x32xf32>
    %533 = arith.mulf %430, %430 : vector<16x32xf32>
    %534 = arith.mulf %431, %431 : vector<16x32xf32>
    %535 = arith.mulf %430, %431 : vector<16x32xf32>
    %536 = tpu.concatenate %430, %431, %533, %534, %535 in 1 : vector<16x32xf32>, vector<16x32xf32>, vector<16x32xf32>, vector<16x32xf32>, vector<16x32xf32> -> vector<16x160xf32>
    %cst_106 = arith.constant dense<0.000000e+00> : vector<1x160xf32>
    %537 = tpu.matmul %17, %536, %cst_106 {dimension_numbers = #tpu.dot_dimension_numbers<[1], [0], [0], [1], [0, 0, 1, 1], [], []>} : vector<1x16xf32>, vector<16x160xf32>, vector<1x160xf32> -> vector<1x160xf32>
    %538 = vector.extract_strided_slice %537 {offsets = [0, 0], sizes = [1, 32], strides = [1, 1]} : vector<1x160xf32> to vector<1x32xf32>
    %539 = vector.shape_cast %538 : vector<1x32xf32> to vector<1x1x32xf32>
    %cst_107 = arith.constant dense<0.000000e+00> : vector<1xf32>
    %540 = vector.multi_reduction <add>, %539, %cst_107 [1, 2] : vector<1x1x32xf32> to vector<1xf32>
    %541 = vector.shape_cast %540 : vector<1xf32> to vector<1x1x1xf32>
    %542 = vector.extract %541[0, 0, 0] : f32 from vector<1x1x1xf32>
    %cst_108 = arith.constant 0.001953125 : f32
    %543 = arith.mulf %542, %cst_108 : f32
    %544 = vector.extract_strided_slice %537 {offsets = [0, 32], sizes = [1, 32], strides = [1, 1]} : vector<1x160xf32> to vector<1x32xf32>
    %545 = vector.shape_cast %544 : vector<1x32xf32> to vector<1x1x32xf32>
    %cst_109 = arith.constant dense<0.000000e+00> : vector<1xf32>
    %546 = vector.multi_reduction <add>, %545, %cst_109 [1, 2] : vector<1x1x32xf32> to vector<1xf32>
    %547 = vector.shape_cast %546 : vector<1xf32> to vector<1x1x1xf32>
    %548 = vector.extract %547[0, 0, 0] : f32 from vector<1x1x1xf32>
    %cst_110 = arith.constant 0.001953125 : f32
    %549 = arith.mulf %548, %cst_110 : f32
    %550 = vector.extract_strided_slice %537 {offsets = [0, 64], sizes = [1, 32], strides = [1, 1]} : vector<1x160xf32> to vector<1x32xf32>
    %551 = vector.shape_cast %550 : vector<1x32xf32> to vector<1x1x32xf32>
    %cst_111 = arith.constant dense<0.000000e+00> : vector<1xf32>
    %552 = vector.multi_reduction <add>, %551, %cst_111 [1, 2] : vector<1x1x32xf32> to vector<1xf32>
    %553 = vector.shape_cast %552 : vector<1xf32> to vector<1x1x1xf32>
    %554 = vector.extract %553[0, 0, 0] : f32 from vector<1x1x1xf32>
    %cst_112 = arith.constant 0.001953125 : f32
    %555 = arith.mulf %554, %cst_112 : f32
    %556 = arith.mulf %543, %543 : f32
    %557 = arith.subf %555, %556 : f32
    %cst_113 = arith.constant 9.99999974E-6 : f32
    %558 = arith.addf %557, %cst_113 : f32
    %559 = vector.extract_strided_slice %537 {offsets = [0, 96], sizes = [1, 32], strides = [1, 1]} : vector<1x160xf32> to vector<1x32xf32>
    %560 = vector.shape_cast %559 : vector<1x32xf32> to vector<1x1x32xf32>
    %cst_114 = arith.constant dense<0.000000e+00> : vector<1xf32>
    %561 = vector.multi_reduction <add>, %560, %cst_114 [1, 2] : vector<1x1x32xf32> to vector<1xf32>
    %562 = vector.shape_cast %561 : vector<1xf32> to vector<1x1x1xf32>
    %563 = vector.extract %562[0, 0, 0] : f32 from vector<1x1x1xf32>
    %cst_115 = arith.constant 0.001953125 : f32
    %564 = arith.mulf %563, %cst_115 : f32
    %565 = arith.mulf %549, %549 : f32
    %566 = arith.subf %564, %565 : f32
    %cst_116 = arith.constant 9.99999974E-6 : f32
    %567 = arith.addf %566, %cst_116 : f32
    %568 = vector.extract_strided_slice %537 {offsets = [0, 128], sizes = [1, 32], strides = [1, 1]} : vector<1x160xf32> to vector<1x32xf32>
    %569 = vector.shape_cast %568 : vector<1x32xf32> to vector<1x1x32xf32>
    %cst_117 = arith.constant dense<0.000000e+00> : vector<1xf32>
    %570 = vector.multi_reduction <add>, %569, %cst_117 [1, 2] : vector<1x1x32xf32> to vector<1xf32>
    %571 = vector.shape_cast %570 : vector<1xf32> to vector<1x1x1xf32>
    %572 = vector.extract %571[0, 0, 0] : f32 from vector<1x1x1xf32>
    %cst_118 = arith.constant 0.001953125 : f32
    %573 = arith.mulf %572, %cst_118 : f32
    %574 = arith.mulf %543, %549 : f32
    %575 = arith.subf %573, %574 : f32
    %576 = arith.mulf %558, %567 : f32
    %577 = arith.mulf %575, %575 : f32
    %578 = arith.subf %576, %577 : f32
    %579 = math.sqrt %578 : f32
    %580 = arith.addf %558, %567 : f32
    %cst_119 = arith.constant 2.000000e+00 : f32
    %581 = arith.mulf %cst_119, %579 : f32
    %582 = arith.addf %580, %581 : f32
    %583 = math.sqrt %582 : f32
    %584 = arith.mulf %579, %583 : f32
    %cst_120 = arith.constant 1.000000e+00 : f32
    %585 = arith.divf %cst_120, %584 : f32
    %586 = arith.addf %567, %579 : f32
    %587 = arith.mulf %586, %585 : f32
    %588 = arith.addf %558, %579 : f32
    %589 = arith.mulf %588, %585 : f32
    %cst_121 = arith.constant 0.000000e+00 : f32
    %590 = arith.subf %cst_121, %575 : f32
    %591 = arith.mulf %590, %585 : f32
    %592 = arith.mulf %0, %587 : f32
    %593 = arith.mulf %2, %591 : f32
    %594 = arith.addf %592, %593 : f32
    %595 = arith.mulf %0, %591 : f32
    %596 = arith.mulf %2, %589 : f32
    %597 = arith.addf %595, %596 : f32
    %598 = arith.mulf %2, %587 : f32
    %599 = arith.mulf %1, %591 : f32
    %600 = arith.addf %598, %599 : f32
    %601 = arith.mulf %2, %591 : f32
    %602 = arith.mulf %1, %589 : f32
    %603 = arith.addf %601, %602 : f32
    %604 = arith.mulf %594, %543 : f32
    %605 = arith.subf %3, %604 : f32
    %606 = arith.mulf %597, %549 : f32
    %607 = arith.subf %605, %606 : f32
    %608 = arith.mulf %600, %543 : f32
    %609 = arith.subf %4, %608 : f32
    %610 = arith.mulf %603, %549 : f32
    %611 = arith.subf %609, %610 : f32
    %612 = vector.broadcast %594 : f32 to vector<16x32xf32>
    %613 = arith.mulf %612, %430 : vector<16x32xf32>
    %614 = vector.broadcast %597 : f32 to vector<16x32xf32>
    %615 = arith.mulf %614, %431 : vector<16x32xf32>
    %616 = arith.addf %613, %615 : vector<16x32xf32>
    %617 = vector.broadcast %607 : f32 to vector<16x32xf32>
    %618 = arith.addf %616, %617 : vector<16x32xf32>
    %619 = vector.broadcast %600 : f32 to vector<16x32xf32>
    %620 = arith.mulf %619, %430 : vector<16x32xf32>
    %621 = vector.broadcast %603 : f32 to vector<16x32xf32>
    %622 = arith.mulf %621, %431 : vector<16x32xf32>
    %623 = arith.addf %620, %622 : vector<16x32xf32>
    %624 = vector.broadcast %611 : f32 to vector<16x32xf32>
    %625 = arith.addf %623, %624 : vector<16x32xf32>
    %626 = arith.addf %618, %529 : vector<16x32xf32>
    %627 = arith.addf %625, %532 : vector<16x32xf32>
    %628 = arith.mulf %626, %626 : vector<16x32xf32>
    %629 = arith.mulf %627, %627 : vector<16x32xf32>
    %630 = arith.mulf %626, %627 : vector<16x32xf32>
    %631 = tpu.concatenate %626, %627, %628, %629, %630 in 1 : vector<16x32xf32>, vector<16x32xf32>, vector<16x32xf32>, vector<16x32xf32>, vector<16x32xf32> -> vector<16x160xf32>
    %cst_122 = arith.constant dense<0.000000e+00> : vector<1x160xf32>
    %632 = tpu.matmul %17, %631, %cst_122 {dimension_numbers = #tpu.dot_dimension_numbers<[1], [0], [0], [1], [0, 0, 1, 1], [], []>} : vector<1x16xf32>, vector<16x160xf32>, vector<1x160xf32> -> vector<1x160xf32>
    %633 = vector.extract_strided_slice %632 {offsets = [0, 0], sizes = [1, 32], strides = [1, 1]} : vector<1x160xf32> to vector<1x32xf32>
    %634 = vector.shape_cast %633 : vector<1x32xf32> to vector<1x1x32xf32>
    %cst_123 = arith.constant dense<0.000000e+00> : vector<1xf32>
    %635 = vector.multi_reduction <add>, %634, %cst_123 [1, 2] : vector<1x1x32xf32> to vector<1xf32>
    %636 = vector.shape_cast %635 : vector<1xf32> to vector<1x1x1xf32>
    %637 = vector.extract %636[0, 0, 0] : f32 from vector<1x1x1xf32>
    %cst_124 = arith.constant 0.001953125 : f32
    %638 = arith.mulf %637, %cst_124 : f32
    %639 = vector.extract_strided_slice %632 {offsets = [0, 32], sizes = [1, 32], strides = [1, 1]} : vector<1x160xf32> to vector<1x32xf32>
    %640 = vector.shape_cast %639 : vector<1x32xf32> to vector<1x1x32xf32>
    %cst_125 = arith.constant dense<0.000000e+00> : vector<1xf32>
    %641 = vector.multi_reduction <add>, %640, %cst_125 [1, 2] : vector<1x1x32xf32> to vector<1xf32>
    %642 = vector.shape_cast %641 : vector<1xf32> to vector<1x1x1xf32>
    %643 = vector.extract %642[0, 0, 0] : f32 from vector<1x1x1xf32>
    %cst_126 = arith.constant 0.001953125 : f32
    %644 = arith.mulf %643, %cst_126 : f32
    %645 = vector.extract_strided_slice %632 {offsets = [0, 64], sizes = [1, 32], strides = [1, 1]} : vector<1x160xf32> to vector<1x32xf32>
    %646 = vector.shape_cast %645 : vector<1x32xf32> to vector<1x1x32xf32>
    %cst_127 = arith.constant dense<0.000000e+00> : vector<1xf32>
    %647 = vector.multi_reduction <add>, %646, %cst_127 [1, 2] : vector<1x1x32xf32> to vector<1xf32>
    %648 = vector.shape_cast %647 : vector<1xf32> to vector<1x1x1xf32>
    %649 = vector.extract %648[0, 0, 0] : f32 from vector<1x1x1xf32>
    %cst_128 = arith.constant 0.001953125 : f32
    %650 = arith.mulf %649, %cst_128 : f32
    %651 = arith.mulf %638, %638 : f32
    %652 = arith.subf %650, %651 : f32
    %cst_129 = arith.constant 9.99999974E-6 : f32
    %653 = arith.addf %652, %cst_129 : f32
    %654 = vector.extract_strided_slice %632 {offsets = [0, 96], sizes = [1, 32], strides = [1, 1]} : vector<1x160xf32> to vector<1x32xf32>
    %655 = vector.shape_cast %654 : vector<1x32xf32> to vector<1x1x32xf32>
    %cst_130 = arith.constant dense<0.000000e+00> : vector<1xf32>
    %656 = vector.multi_reduction <add>, %655, %cst_130 [1, 2] : vector<1x1x32xf32> to vector<1xf32>
    %657 = vector.shape_cast %656 : vector<1xf32> to vector<1x1x1xf32>
    %658 = vector.extract %657[0, 0, 0] : f32 from vector<1x1x1xf32>
    %cst_131 = arith.constant 0.001953125 : f32
    %659 = arith.mulf %658, %cst_131 : f32
    %660 = arith.mulf %644, %644 : f32
    %661 = arith.subf %659, %660 : f32
    %cst_132 = arith.constant 9.99999974E-6 : f32
    %662 = arith.addf %661, %cst_132 : f32
    %663 = vector.extract_strided_slice %632 {offsets = [0, 128], sizes = [1, 32], strides = [1, 1]} : vector<1x160xf32> to vector<1x32xf32>
    %664 = vector.shape_cast %663 : vector<1x32xf32> to vector<1x1x32xf32>
    %cst_133 = arith.constant dense<0.000000e+00> : vector<1xf32>
    %665 = vector.multi_reduction <add>, %664, %cst_133 [1, 2] : vector<1x1x32xf32> to vector<1xf32>
    %666 = vector.shape_cast %665 : vector<1xf32> to vector<1x1x1xf32>
    %667 = vector.extract %666[0, 0, 0] : f32 from vector<1x1x1xf32>
    %cst_134 = arith.constant 0.001953125 : f32
    %668 = arith.mulf %667, %cst_134 : f32
    %669 = arith.mulf %638, %644 : f32
    %670 = arith.subf %668, %669 : f32
    %671 = arith.mulf %653, %662 : f32
    %672 = arith.mulf %670, %670 : f32
    %673 = arith.subf %671, %672 : f32
    %674 = math.sqrt %673 : f32
    %675 = arith.addf %653, %662 : f32
    %cst_135 = arith.constant 2.000000e+00 : f32
    %676 = arith.mulf %cst_135, %674 : f32
    %677 = arith.addf %675, %676 : f32
    %678 = math.sqrt %677 : f32
    %679 = arith.mulf %674, %678 : f32
    %cst_136 = arith.constant 1.000000e+00 : f32
    %680 = arith.divf %cst_136, %679 : f32
    %681 = arith.addf %662, %674 : f32
    %682 = arith.mulf %681, %680 : f32
    %683 = arith.addf %653, %674 : f32
    %684 = arith.mulf %683, %680 : f32
    %cst_137 = arith.constant 0.000000e+00 : f32
    %685 = arith.subf %cst_137, %670 : f32
    %686 = arith.mulf %685, %680 : f32
    %687 = arith.mulf %0, %682 : f32
    %688 = arith.mulf %2, %686 : f32
    %689 = arith.addf %687, %688 : f32
    %690 = arith.mulf %0, %686 : f32
    %691 = arith.mulf %2, %684 : f32
    %692 = arith.addf %690, %691 : f32
    %693 = arith.mulf %2, %682 : f32
    %694 = arith.mulf %1, %686 : f32
    %695 = arith.addf %693, %694 : f32
    %696 = arith.mulf %2, %686 : f32
    %697 = arith.mulf %1, %684 : f32
    %698 = arith.addf %696, %697 : f32
    %699 = arith.mulf %689, %638 : f32
    %700 = arith.subf %3, %699 : f32
    %701 = arith.mulf %692, %644 : f32
    %702 = arith.subf %700, %701 : f32
    %703 = arith.mulf %695, %638 : f32
    %704 = arith.subf %4, %703 : f32
    %705 = arith.mulf %698, %644 : f32
    %706 = arith.subf %704, %705 : f32
    %707 = vector.broadcast %689 : f32 to vector<16x32xf32>
    %708 = arith.mulf %707, %626 : vector<16x32xf32>
    %709 = vector.broadcast %692 : f32 to vector<16x32xf32>
    %710 = arith.mulf %709, %627 : vector<16x32xf32>
    %711 = arith.addf %708, %710 : vector<16x32xf32>
    %712 = vector.broadcast %702 : f32 to vector<16x32xf32>
    %713 = arith.addf %711, %712 : vector<16x32xf32>
    %714 = vector.broadcast %695 : f32 to vector<16x32xf32>
    %715 = arith.mulf %714, %626 : vector<16x32xf32>
    %716 = vector.broadcast %698 : f32 to vector<16x32xf32>
    %717 = arith.mulf %716, %627 : vector<16x32xf32>
    %718 = arith.addf %715, %717 : vector<16x32xf32>
    %719 = vector.broadcast %706 : f32 to vector<16x32xf32>
    %720 = arith.addf %718, %719 : vector<16x32xf32>
    %721 = math.tanh %713 : vector<16x32xf32>
    %722 = math.tanh %720 : vector<16x32xf32>
    %723 = tpu.concatenate %215, %223, %421, %429, %721, %722 in 1 : vector<16x32xf32>, vector<16x32xf32>, vector<16x32xf32>, vector<16x32xf32>, vector<16x32xf32>, vector<16x32xf32> -> vector<16x192xf32>
    %c0_138 = arith.constant 0 : index
    %c0_139 = arith.constant 0 : index
    %724 = vector.load %arg7[%c0_138, %c0_139] : memref<16x192xf32, #tpu.memory_space<vmem>>, vector<16x192xf32>
    tpu.vector_store %arg7[%c0_138, %c0_139], %723 {strides = array<i32>} : memref<16x192xf32, #tpu.memory_space<vmem>>, vector<16x192xf32>,
    return
  }
}

</mosaic_0001>

<llo_original>
// kernel: custom-call.1
$region0: #{custom-call.1}
  %s0 = inlined_call_operand.hbm [shape: c64[2,1,8,16], index: 0, kind: input, shape index: {}]
  %s1 = inlined_call_operand.vmem [shape: f32[2,1,8,16], index: 1, kind: output, shape index: {}]
  %s2 = scalar_lea.hbm %s0, 256
  $region1: #{custom-call.1} parent=0
    #allocation0 [shape = 's32[1]{0}', space=sflag, size = 0x4, scoped, tag = 'scoped memory for custom-call.1']
    %3 = vsyncpa [#allocation0], 0
    %s4 = sshll.u32 %s1, 4
    %s5 = int_to_ptr.vmem [resolvable:$true] %s4
    %7 = dma.hbm_to_vmem [thread:$0]  %s2, 256, %s5, [#allocation0]
    %8 = dma.done [#allocation0], 256
    %9 = vsyncpa [#allocation0], 1

// kernel: custom-call
$region0: #{custom-call}
  %s0 = inlined_call_operand.hbm [shape: c64[2,1,8,16], index: 0, kind: input, shape index: {}]
  %s1 = inlined_call_operand.vmem [shape: f32[2,1,8,16], index: 1, kind: output, shape index: {}]
  $region1: #{custom-call} parent=0
    #allocation0 [shape = 's32[1]{0}', space=sflag, size = 0x4, scoped, tag = 'scoped memory for custom-call']
    %2 = vsyncpa [#allocation0], 0
    %s3 = sshll.u32 %s1, 4
    %s4 = int_to_ptr.vmem [resolvable:$true] %s3
    %6 = dma.hbm_to_vmem [thread:$0]  %s0, 256, %s4, [#allocation0]
    %7 = dma.done [#allocation0], 256
    %8 = vsyncpa [#allocation0], 1

// kernel: custom-call.3
$region0: #{custom-call.3}
  %s0 = inlined_call_operand.hbm [shape: c64[2,1,8,32], index: 0, kind: input, shape index: {}]
  %s1 = inlined_call_operand.vmem [shape: f32[2,1,8,32], index: 1, kind: output, shape index: {}]
  %s2 = scalar_lea.hbm %s0, 256
  $region1: #{custom-call.3} parent=0
    #allocation0 [shape = 's32[1]{0}', space=sflag, size = 0x4, scoped, tag = 'scoped memory for custom-call.3']
    %3 = vsyncpa [#allocation0], 0
    %s4 = sshll.u32 %s1, 4
    %s5 = int_to_ptr.vmem [resolvable:$true] %s4
    %7 = dma.hbm_to_vmem [thread:$0]  %s2, 256, %s5, [#allocation0]
    %8 = dma.done [#allocation0], 256
    %9 = vsyncpa [#allocation0], 1

// kernel: custom-call.2
$region0: #{custom-call.2}
  %s0 = inlined_call_operand.hbm [shape: c64[2,1,8,32], index: 0, kind: input, shape index: {}]
  %s1 = inlined_call_operand.vmem [shape: f32[2,1,8,32], index: 1, kind: output, shape index: {}]
  $region1: #{custom-call.2} parent=0
    #allocation0 [shape = 's32[1]{0}', space=sflag, size = 0x4, scoped, tag = 'scoped memory for custom-call.2']
    %2 = vsyncpa [#allocation0], 0
    %s3 = sshll.u32 %s1, 4
    %s4 = int_to_ptr.vmem [resolvable:$true] %s3
    %6 = dma.hbm_to_vmem [thread:$0]  %s0, 256, %s4, [#allocation0]
    %7 = dma.done [#allocation0], 256
    %8 = vsyncpa [#allocation0], 1

// kernel: custom-call.6
$region0: #{custom-call.6}
  %s0 = inlined_call_operand.vmem [shape: f32[2,1,8,32], index: 0, kind: input, shape index: {}]
  %s1 = inlined_call_operand.vmem [shape: f32[2,1,8,32], index: 1, kind: input, shape index: {}]
  %s2 = inlined_call_operand.hbm [shape: c64[2,1,8,32], index: 2, kind: output, shape index: {}]
  %s3 = scalar_lea.hbm %s2, 256
  $region1: #{custom-call.6} parent=0
    #allocation0 [shape = 's32[1]{0}', space=sflag, size = 0x4, scoped, tag = 'scoped memory for custom-call.6']
    %4 = vsyncpa [#allocation0], 0
    %s5 = sshll.u32 %s0, 4
    %s6 = int_to_ptr.vmem [resolvable:$true] %s5
    %8 = dma.vmem_to_hbm [thread:$0]  %s6, 256, %s2, [#allocation0]
    %9 = dma.done [#allocation0], 256
    %10 = vsyncpa [#allocation0], 1
  $region2: #{custom-call.6} parent=0
    #allocation1 [shape = 's32[1]{0}', space=sflag, size = 0x4, scoped, tag = 'scoped memory for custom-call.6']
    %11 = vsyncpa [#allocation1], 0
    %s12 = sshll.u32 %s1, 4
    %s13 = int_to_ptr.vmem [resolvable:$true] %s12
    %15 = dma.vmem_to_hbm [thread:$0]  %s13, 256, %s3, [#allocation1]
    %16 = dma.done [#allocation1], 256
    %17 = vsyncpa [#allocation1], 1

// kernel: complex_bn_gru_cell.1
$region0: #{complex_bn_gru_cell.1}
  #allocation0 [shape = 'u32[]', space=smem, size = 0x4, offset = 0x4, fixed_abs, tag = 'smem constant byte address 0x4 - core index']
  #allocation1 [shape = 'u32[144,128]{1,0:T(1,128)}', space=vmem, size = 0x12000, scoped, tag = 'internal scratch']
  %s0 = inlined_call_operand.vmem [shape: f32[5], index: 0, kind: input, shape index: {}]
  %s1 = inlined_call_operand.vmem [shape: bf16[16,32], index: 1, kind: input, shape index: {}]
  %s2 = inlined_call_operand.vmem [shape: bf16[16,64], index: 2, kind: input, shape index: {}]
  %s3 = inlined_call_operand.vmem [shape: bf16[32,192], index: 3, kind: input, shape index: {}]
  %s4 = inlined_call_operand.vmem [shape: bf16[64,192], index: 4, kind: input, shape index: {}]
  %s5 = inlined_call_operand.vmem [shape: f32[1,192], index: 5, kind: input, shape index: {}]
  %s6 = inlined_call_operand.vmem [shape: f32[1,192], index: 6, kind: input, shape index: {}]
  %s7 = inlined_call_operand.vmem [shape: f32[16,192], index: 7, kind: output, shape index: {}]
  %s8 = sld [smem:[#allocation0]]
  $region42: #{complex_bn_gru_cell.1} parent=0
    _
  %s10 = ssub.s32 1, %s8
  %s11 = scalar_select 0, %s10, %s8
  $region1: #{complex_bn_gru_cell.1} parent=0
    #allocation2 [shape = 'u8[512]{0}', space=smem, size = 0x200, scoped, tag = 'input window, operand 0, single buffered']
    #allocation3 [shape = 's32[1]{0}', space=sflag, size = 0x4, scoped, tag = 'scoped memory for complex_bn_gru_cell.1']
    %12 = vsyncpa [#allocation3], 0
    // Predicated region
    $region2: #{complex_bn_gru_cell.1} parent=1 // pred_check
      _
    $region3: #{complex_bn_gru_cell.1} parent=1 // pred_check_branch
      %14 = sbr.rel (0) target = $region5
    $region4: #{complex_bn_gru_cell.1} parent=1 // pred_region
      %s16 = ssub.s32 16, 16
      %17 = vsyncadd [#allocation3], %s16
      %s19 = sshll.u32 %s0, 4
      %s20 = int_to_ptr.vmem [resolvable:$true] %s19
      %22 = dma.vmem_to_smem %s20, 16, [#allocation2], [#allocation3]
    $region5: #{complex_bn_gru_cell.1} parent=1 // pred_fallthru
      _
    // Predicated region
    $region6: #{complex_bn_gru_cell.1} parent=1 // pred_check
      _
    $region7: #{complex_bn_gru_cell.1} parent=1 // pred_check_branch
      %24 = sbr.rel (0) target = $region9
    $region8: #{complex_bn_gru_cell.1} parent=1 // pred_region
      _
    $region9: #{complex_bn_gru_cell.1} parent=1 // pred_fallthru
      _
    // Predicated region
    $region10: #{complex_bn_gru_cell.1} parent=1 // pred_check
      _
    $region11: #{complex_bn_gru_cell.1} parent=1 // pred_check_branch
      %26 = sbr.rel (0) target = $region13
    $region12: #{complex_bn_gru_cell.1} parent=1 // pred_region
      _
    $region13: #{complex_bn_gru_cell.1} parent=1 // pred_fallthru
      _
    // Predicated region
    $region14: #{complex_bn_gru_cell.1} parent=1 // pred_check
      _
    $region15: #{complex_bn_gru_cell.1} parent=1 // pred_check_branch
      %28 = sbr.rel (0) target = $region17
    $region16: #{complex_bn_gru_cell.1} parent=1 // pred_region
      _
    $region17: #{complex_bn_gru_cell.1} parent=1 // pred_fallthru
      _
    // Predicated region
    $region18: #{complex_bn_gru_cell.1} parent=1 // pred_check
      _
    $region19: #{complex_bn_gru_cell.1} parent=1 // pred_check_branch
      %30 = sbr.rel (0) target = $region21
    $region20: #{complex_bn_gru_cell.1} parent=1 // pred_region
      _
    $region21: #{complex_bn_gru_cell.1} parent=1 // pred_fallthru
      _
    // Predicated region
    $region22: #{complex_bn_gru_cell.1} parent=1 // pred_check
      _
    $region23: #{complex_bn_gru_cell.1} parent=1 // pred_check_branch
      %32 = sbr.rel (0) target = $region25
    $region24: #{complex_bn_gru_cell.1} parent=1 // pred_region
      _
    $region25: #{complex_bn_gru_cell.1} parent=1 // pred_fallthru
      _
    // Predicated region
    $region26: #{complex_bn_gru_cell.1} parent=1 // pred_check
      _
    $region27: #{complex_bn_gru_cell.1} parent=1 // pred_check_branch
      %34 = sbr.rel (0) target = $region29
    $region28: #{complex_bn_gru_cell.1} parent=1 // pred_region
      _
    $region29: #{complex_bn_gru_cell.1} parent=1 // pred_fallthru
      _
    // Predicated region
    $region30: #{complex_bn_gru_cell.1} parent=1 // pred_check
      _
    $region31: #{complex_bn_gru_cell.1} parent=1 // pred_check_branch
      %36 = sbr.rel (0) target = $region33
    $region32: #{complex_bn_gru_cell.1} parent=1 // pred_region
      %37 = dma.done [#allocation3], 16
    $region33: #{complex_bn_gru_cell.1} parent=1 // pred_fallthru
      _
    %38 = sfence
    %s40 = sld [smem:[#allocation2]]
    %s41 = sld [smem:[#allocation2 + $0x1]]
    %s42 = sld [smem:[#allocation2 + $0x2]]
    %s43 = sld [smem:[#allocation2 + $0x3]]
    %s44 = sld [smem:[#allocation2 + $0x4]]
    %v45 = vld [vmem:[%s1] sm:$0xf]
    %v46 = vld [vmem:[%s1 + $0x4] sm:$0xf]
    %v47 = vld [vmem:[%s3] sm:$0xff]
    %v48 = vld [vmem:[%s3 + $0x8] sm:$0xff]
    %v49 = vld [vmem:[%s3 + $0x10] sm:$0xff]
    %v50 = vld [vmem:[%s3 + $0x18] sm:$0xff]
    %v51 = vld [vmem:[%s5] sm:$0x3]
    %v53 = vlaneseq
    %v54 = vshrl.u32 %v53, 7
    %v55 = vsub.s32 0, %v54
    %v56 = vrot.slane %v51, %v55
    %v57 = vlaneseq
    %v58 = vshrl.u32 %v57, 7
    %v59 = vsub.s32 1, %v58
    %v60 = vrot.slane %v51, %v59
    %v65 = vunpack.c.l.b16 %v45
    %v66 = vunpack.c.l.b16 %v46
    %v67 = vpack.c.b16 %v66, %v65
    %v72 = vunpack.c.l.b16 %v47
    %v73 = vunpack.c.h.b16 %v47
    %v74 = vunpack.c.l.b16 %v48
    %v75 = vunpack.c.h.b16 %v48
    %v76 = vunpack.c.l.b16 %v49
    %v77 = vunpack.c.h.b16 %v49
    %v78 = vunpack.c.l.b16 %v50
    %v79 = vunpack.c.h.b16 %v50
    %v80 = vpack.c.b16 %v74, %v72
    %v81 = vpack.c.b16 %v75, %v73
    %v82 = vpack.c.b16 %v78, %v76
    %v83 = vpack.c.b16 %v79, %v77
    %vm88 = vcmask 261120
    %v90 = vsel %vm88, %v67, 0
    %92 = vmatprep.subr.bf16.mxu0 0
    %93 = vmatpush1.bf16.msra.mxu0 0
    %94 = vmatprep.subr.bf16.mxu0 0
    %95 = vmatpush1.bf16.msra.mxu0 0
    %96 = vmatprep.subr.bf16.mxu0 0
    %97 = vmatpush1.bf16.msra.mxu0 0
    %98 = vmatprep.subr.bf16.mxu0 0
    %99 = vmatpush1.bf16.msra.mxu0 0
    %100 = vmatprep.subr.bf16.mxu0 0
    %101 = vmatpush1.bf16.msra.mxu0 0
    %102 = vmatprep.subr.bf16.mxu0 0
    %103 = vmatpush1.bf16.msra.mxu0 0
    %104 = vmatprep.subr.bf16.mxu0 %v83
    %105 = vmatpush1.bf16.msra.mxu0 %v82
    %106 = vmatprep.subr.bf16.mxu0 %v81
    %107 = vmatpush1.bf16.msra.mxu0 %v80
    %108 = vmatprep.subr.bf16.mxu0 0
    %109 = vmatpush2.bf16.msra.mxu0 0
    %110 = vmatprep.subr.bf16.mxu0 0
    %111 = vmatpush2.bf16.msra.mxu0 0
    %112 = vmatprep.subr.bf16.mxu0 0
    %113 = vmatpush2.bf16.msra.mxu0 0
    %114 = vmatprep.subr.bf16.mxu0 0
    %115 = vmatpush2.bf16.msra.mxu0 0
    %116 = vmatprep.subr.bf16.mxu0 0
    %117 = vmatpush2.bf16.msra.mxu0 0
    %118 = vmatprep.subr.bf16.mxu0 0
    %119 = vmatpush2.bf16.msra.mxu0 0
    %120 = vmatprep.subr.bf16.mxu0 0
    %121 = vmatpush2.bf16.msra.mxu0 0
    %122 = vmatprep.subr.bf16.mxu0 0
    %123 = vmatpush2.bf16.msra.mxu0 0
    %124 = vmatprep.mubr.bf16.mxu0 0
    %125 = vmatmul.mubr.bf16.gmra.mxu0 %v90
    %v126 = vpop.f32.mrf.mxu0
    %v127 = vadd.f32 %v56, %v126
    %v128 = vpop.f32.mrf.mxu0
    %v129 = vadd.f32 %v60, %v128
    %v130 = vpop.f32.mrf.mxu0
    %v131 = vadd.f32 %v56, %v130
    %v132 = vpop.f32.mrf.mxu0
    %v133 = vadd.f32 %v60, %v132
    %134 = vdwg.mxu0
    %v135 = vld [vmem:[%s2] sm:$0xf]
    %v136 = vld [vmem:[%s2 + $0x4] sm:$0xf]
    %v137 = vld [vmem:[%s4] sm:$0xff]
    %v138 = vld [vmem:[%s4 + $0x8] sm:$0xff]
    %v139 = vld [vmem:[%s4 + $0x10] sm:$0xff]
    %v140 = vld [vmem:[%s4 + $0x18] sm:$0xff]
    %v141 = vld [vmem:[%s4 + $0x20] sm:$0xff]
    %v142 = vld [vmem:[%s4 + $0x28] sm:$0xff]
    %v143 = vld [vmem:[%s4 + $0x30] sm:$0xff]
    %v144 = vld [vmem:[%s4 + $0x38] sm:$0xff]
    %v145 = vld [vmem:[%s6] sm:$0x3]
    %v147 = vlaneseq
    %v148 = vshrl.u32 %v147, 7
    %v149 = vsub.s32 0, %v148
    %v150 = vrot.slane %v145, %v149
    %v151 = vlaneseq
    %v152 = vshrl.u32 %v151, 7
    %v153 = vsub.s32 1, %v152
    %v154 = vrot.slane %v145, %v153
    %v159 = vunpack.c.l.b16 %v135
    %v160 = vunpack.c.l.b16 %v136
    %v161 = vpack.c.b16 %v160, %v159
    %v170 = vunpack.c.l.b16 %v137
    %v171 = vunpack.c.h.b16 %v137
    %v172 = vunpack.c.l.b16 %v138
    %v173 = vunpack.c.h.b16 %v138
    %v174 = vunpack.c.l.b16 %v139
    %v175 = vunpack.c.h.b16 %v139
    %v176 = vunpack.c.l.b16 %v140
    %v177 = vunpack.c.h.b16 %v140
    %v178 = vunpack.c.l.b16 %v141
    %v179 = vunpack.c.h.b16 %v141
    %v180 = vunpack.c.l.b16 %v142
    %v181 = vunpack.c.h.b16 %v142
    %v182 = vunpack.c.l.b16 %v143
    %v183 = vunpack.c.h.b16 %v143
    %v184 = vunpack.c.l.b16 %v144
    %v185 = vunpack.c.h.b16 %v144
    %v186 = vpack.c.b16 %v172, %v170
    %v187 = vpack.c.b16 %v173, %v171
    %v188 = vpack.c.b16 %v176, %v174
    %v189 = vpack.c.b16 %v177, %v175
    %v190 = vpack.c.b16 %v180, %v178
    %v191 = vpack.c.b16 %v181, %v179
    %v192 = vpack.c.b16 %v184, %v182
    %v193 = vpack.c.b16 %v185, %v183
    %vm202 = vcmask 523264
    %v204 = vsel %vm202, %v161, 0
    %206 = vmatprep.subr.bf16.mxu0 0
    %207 = vmatpush1.bf16.msra.mxu0 0
    %208 = vmatprep.subr.bf16.mxu0 0
    %209 = vmatpush1.bf16.msra.mxu0 0
    %210 = vmatprep.subr.bf16.mxu0 0
    %211 = vmatpush1.bf16.msra.mxu0 0
    %212 = vmatprep.subr.bf16.mxu0 0
    %213 = vmatpush1.bf16.msra.mxu0 0
    %214 = vmatprep.subr.bf16.mxu0 %v193
    %215 = vmatpush1.bf16.msra.mxu0 %v192
    %216 = vmatprep.subr.bf16.mxu0 %v191
    %217 = vmatpush1.bf16.msra.mxu0 %v190
    %218 = vmatprep.subr.bf16.mxu0 %v189
    %219 = vmatpush1.bf16.msra.mxu0 %v188
    %220 = vmatprep.subr.bf16.mxu0 %v187
    %221 = vmatpush1.bf16.msra.mxu0 %v186
    %222 = vmatprep.subr.bf16.mxu0 0
    %223 = vmatpush2.bf16.msra.mxu0 0
    %224 = vmatprep.subr.bf16.mxu0 0
    %225 = vmatpush2.bf16.msra.mxu0 0
    %226 = vmatprep.subr.bf16.mxu0 0
    %227 = vmatpush2.bf16.msra.mxu0 0
    %228 = vmatprep.subr.bf16.mxu0 0
    %229 = vmatpush2.bf16.msra.mxu0 0
    %230 = vmatprep.subr.bf16.mxu0 0
    %231 = vmatpush2.bf16.msra.mxu0 0
    %232 = vmatprep.subr.bf16.mxu0 0
    %233 = vmatpush2.bf16.msra.mxu0 0
    %234 = vmatprep.subr.bf16.mxu0 0
    %235 = vmatpush2.bf16.msra.mxu0 0
    %236 = vmatprep.subr.bf16.mxu0 0
    %237 = vmatpush2.bf16.msra.mxu0 0
    %238 = vmatprep.mubr.bf16.mxu0 0
    %239 = vmatmul.mubr.bf16.gmra.mxu0 %v204
    %v240 = vpop.f32.mrf.mxu0
    %v241 = vadd.f32 %v150, %v240
    %v242 = vpop.f32.mrf.mxu0
    %v243 = vadd.f32 %v154, %v242
    %v244 = vpop.f32.mrf.mxu0
    %v245 = vadd.f32 %v150, %v244
    %v246 = vpop.f32.mrf.mxu0
    %v247 = vadd.f32 %v154, %v246
    %248 = vdwg.mxu0
    %v249 = vmul.f32 %v127, %v127
    %v250 = vmul.f32 %v131, %v131
    %253 = vrot.lane.b32.xlu0 %v127, 96
    %v254 = vpop.permute.xlu0 %253
    %255 = vrot.lane.b32.xlu0 %v131, 96
    %v256 = vpop.permute.xlu0 %255
    %v259 = vmul.f32 %v127, %v254
    %v260 = vmul.f32 %v131, %v256
    %263 = vrot.lane.b32.xlu0 %v249, 64
    %v264 = vpop.permute.xlu0 %263
    %265 = vrot.lane.b32.xlu0 %v250, 64
    %v266 = vpop.permute.xlu0 %265
    %v269 = vsel %vm202, %v127, %v264
    %v270 = vsel %vm202, %v131, %v266
    %vm271 = vcmask 785408
    %v272 = vsel %vm271, %v269, %v264
    %v273 = vsel %vm271, %v270, %v266
    %vm274 = vcmask 130048
    %v276 = vsel %vm274, 1.0, 0
    %278 = vmatprep.subr.mxu0 0.0
    %279 = vmatpush1.msra.mxu0 0.0
    %280 = vmatprep.subr.mxu0 0.0
    %281 = vmatpush1.msra.mxu0 0.0
    %282 = vmatprep.subr.mxu0 0.0
    %283 = vmatpush1.msra.mxu0 0.0
    %284 = vmatprep.subr.mxu0 0.0
    %285 = vmatpush1.msra.mxu0 0.0
    %286 = vmatprep.subr.mxu0 0.0
    %287 = vmatpush1.msra.mxu0 0.0
    %288 = vmatprep.subr.mxu0 0.0
    %289 = vmatpush1.msra.mxu0 0.0
    %290 = vmatprep.subr.mxu0 0.0
    %291 = vmatpush1.msra.mxu0 0.0
    %292 = vmatprep.subr.mxu0 0.0
    %293 = vmatpush1.msra.mxu0 0.0
    %294 = vmatprep.subr.mxu0 0.0
    %295 = vmatpush1.msra.mxu0 0.0
    %296 = vmatprep.subr.mxu0 0.0
    %297 = vmatpush1.msra.mxu0 0.0
    %298 = vmatprep.subr.mxu0 0.0
    %299 = vmatpush1.msra.mxu0 0.0
    %300 = vmatprep.subr.mxu0 0.0
    %301 = vmatpush1.msra.mxu0 0.0
    %302 = vmatprep.subr.mxu0 0.0
    %303 = vmatpush1.msra.mxu0 0.0
    %304 = vmatprep.subr.mxu0 0.0
    %305 = vmatpush1.msra.mxu0 0.0
    %306 = vmatprep.subr.mxu0 %v260
    %307 = vmatpush1.msra.mxu0 %v273
    %308 = vmatprep.subr.mxu0 %v259
    %309 = vmatpush1.msra.mxu0 %v272
    %310 = vmatprep.subr.mxu0 0.0
    %311 = vmatpush2.msra.mxu0 0.0
    %312 = vmatprep.subr.mxu0 0.0
    %313 = vmatpush2.msra.mxu0 0.0
    %314 = vmatprep.subr.mxu0 0.0
    %315 = vmatpush2.msra.mxu0 0.0
    %316 = vmatprep.subr.mxu0 0.0
    %317 = vmatpush2.msra.mxu0 0.0
    %318 = vmatprep.subr.mxu0 0.0
    %319 = vmatpush2.msra.mxu0 0.0
    %320 = vmatprep.subr.mxu0 0.0
    %321 = vmatpush2.msra.mxu0 0.0
    %322 = vmatprep.subr.mxu0 0.0
    %323 = vmatpush2.msra.mxu0 0.0
    %324 = vmatprep.subr.mxu0 0.0
    %325 = vmatpush2.msra.mxu0 0.0
    %326 = vmatprep.subr.mxu0 0.0
    %327 = vmatpush2.msra.mxu0 0.0
    %328 = vmatprep.subr.mxu0 0.0
    %329 = vmatpush2.msra.mxu0 0.0
    %330 = vmatprep.subr.mxu0 0.0
    %331 = vmatpush2.msra.mxu0 0.0
    %332 = vmatprep.subr.mxu0 0.0
    %333 = vmatpush2.msra.mxu0 0.0
    %334 = vmatprep.subr.mxu0 0.0
    %335 = vmatpush2.msra.mxu0 0.0
    %336 = vmatprep.subr.mxu0 0.0
    %337 = vmatpush2.msra.mxu0 0.0
    %338 = vmatprep.subr.mxu0 0.0
    %339 = vmatpush2.msra.mxu0 0.0
    %340 = vmatprep.subr.mxu0 0.0
    %341 = vmatpush2.msra.mxu0 0.0
    %342 = vmatprep.mubr.f32.mxu0 0.0
    %343 = vmatmul.mubr.f32.gmra.mxu0 %v276
    %v344 = vpop.f32.mrf.mxu0
    %v345 = vadd.f32 0.0, %v344
    %v346 = vpop.f32.mrf.mxu0
    %v347 = vadd.f32 0.0, %v346
    %348 = vdwg.mxu0
    %vm349 = vcmask 253952
    %v350 = vsel %vm349, %v345, 0.0
    %351 = vadd.xlane.f32.xlu0 %v350
    %v352 = vpop.xlane.xlu0 %351
    %v353 = vrot.slane %v352, 4
    %v354 = vadd.f32 %v352, %v353
    %v355 = vrot.slane %v354, 2
    %v356 = vadd.f32 %v354, %v355
    %v357 = vrot.slane %v356, 1
    %v358 = vadd.f32 %v356, %v357
    %s359 = vtos %v358
    %s360 = smul.f32 %s359, 0.001953125
    %362 = vrot.lane.b32.xlu0 %v345, 96
    %v363 = vpop.permute.xlu0 %362
    %v365 = vsel %vm349, %v363, 0.0
    %366 = vadd.xlane.f32.xlu0 %v365
    %v367 = vpop.xlane.xlu0 %366
    %v368 = vrot.slane %v367, 4
    %v369 = vadd.f32 %v367, %v368
    %v370 = vrot.slane %v369, 2
    %v371 = vadd.f32 %v369, %v370
    %v372 = vrot.slane %v371, 1
    %v373 = vadd.f32 %v371, %v372
    %s374 = vtos %v373
    %s375 = smul.f32 %s374, 0.001953125
    %376 = vrot.lane.b32.xlu0 %v345, 64
    %v377 = vpop.permute.xlu0 %376
    %v379 = vsel %vm349, %v377, 0.0
    %380 = vadd.xlane.f32.xlu0 %v379
    %v381 = vpop.xlane.xlu0 %380
    %v382 = vrot.slane %v381, 4
    %v383 = vadd.f32 %v381, %v382
    %v384 = vrot.slane %v383, 2
    %v385 = vadd.f32 %v383, %v384
    %v386 = vrot.slane %v385, 1
    %v387 = vadd.f32 %v385, %v386
    %s388 = vtos %v387
    %s389 = smul.f32 %s388, 0.001953125
    %s390 = smul.f32 %s360, %s360
    %s391 = ssub.f32 %s389, %s390
    %s392 = sadd.f32 %s391, 1e-05
    %393 = vrot.lane.b32.xlu0 %v345, 32
    %v394 = vpop.permute.xlu0 %393
    %v396 = vsel %vm349, %v394, 0.0
    %397 = vadd.xlane.f32.xlu0 %v396
    %v398 = vpop.xlane.xlu0 %397
    %v399 = vrot.slane %v398, 4
    %v400 = vadd.f32 %v398, %v399
    %v401 = vrot.slane %v400, 2
    %v402 = vadd.f32 %v400, %v401
    %v403 = vrot.slane %v402, 1
    %v404 = vadd.f32 %v402, %v403
    %s405 = vtos %v404
    %s406 = smul.f32 %s405, 0.001953125
    %s407 = smul.f32 %s375, %s375
    %s408 = ssub.f32 %s406, %s407
    %s409 = sadd.f32 %s408, 1e-05
    %v410 = vsel %vm349, %v347, 0.0
    %411 = vadd.xlane.f32.xlu0 %v410
    %v412 = vpop.xlane.xlu0 %411
    %v413 = vrot.slane %v412, 4
    %v414 = vadd.f32 %v412, %v413
    %v415 = vrot.slane %v414, 2
    %v416 = vadd.f32 %v414, %v415
    %v417 = vrot.slane %v416, 1
    %v418 = vadd.f32 %v416, %v417
    %s419 = vtos %v418
    %s420 = smul.f32 %s419, 0.001953125
    %s421 = smul.f32 %s360, %s375
    %s422 = ssub.f32 %s420, %s421
    %s423 = smul.f32 %s392, %s409
    %s424 = smul.f32 %s422, %s422
    %s425 = ssub.f32 %s423, %s424
    %v426 = vstv %s425
    %v427 = vrsqrt.pop %v426
    %v428 = vmul.f32 %v426, %v427
    %vm429 = vcmp.eq.f32.partialorder %v426, inf
    %v430 = vsel %vm429, %v426, %v428
    %vm431 = vcmp.eq.f32.partialorder %v426, 0.0
    %v432 = vand.u32 %v426, 2147483648
    %v433 = vsel %vm431, %v432, %v430
    %s434 = vtos %v433
    %s435 = sadd.f32 %s392, %s409
    %s436 = smul.f32 %s434, 2.0
    %s437 = sadd.f32 %s435, %s436
    %v438 = vstv %s437
    %v439 = vrsqrt.pop %v438
    %v440 = vmul.f32 %v438, %v439
    %vm441 = vcmp.eq.f32.partialorder %v438, inf
    %v442 = vsel %vm441, %v438, %v440
    %vm443 = vcmp.eq.f32.partialorder %v438, 0.0
    %v444 = vand.u32 %v438, 2147483648
    %v445 = vsel %vm443, %v444, %v442
    %s446 = vtos %v445
    %s447 = smul.f32 %s434, %s446
    %v448 = vstv %s447
    %v449 = vrcp.pop %v448
    %s450 = vtos %v449
    %s451 = sadd.f32 %s409, %s434
    %s452 = smul.f32 %s451, %s450
    %s453 = sadd.f32 %s392, %s434
    %s454 = smul.f32 %s453, %s450
    %s455 = ssub.f32 0.0, %s422
    %s456 = smul.f32 %s455, %s450
    %s457 = smul.f32 %s40, %s452
    %s458 = smul.f32 %s42, %s456
    %s459 = sadd.f32 %s457, %s458
    %s460 = smul.f32 %s40, %s456
    %s461 = smul.f32 %s42, %s454
    %s462 = sadd.f32 %s460, %s461
    %s463 = smul.f32 %s42, %s452
    %s464 = smul.f32 %s41, %s456
    %s465 = sadd.f32 %s463, %s464
    %s466 = smul.f32 %s41, %s454
    %s467 = sadd.f32 %s458, %s466
    %s468 = smul.f32 %s459, %s360
    %s469 = ssub.f32 %s43, %s468
    %s470 = smul.f32 %s462, %s375
    %s471 = ssub.f32 %s469, %s470
    %s472 = smul.f32 %s465, %s360
    %s473 = ssub.f32 %s44, %s472
    %s474 = smul.f32 %s467, %s375
    %s475 = ssub.f32 %s473, %s474
    %v476 = vstv %s459
    %v477 = vmul.f32 %v476, %v127
    %v478 = vmul.f32 %v476, %v131
    %v479 = vstv %s462
    %v480 = vmul.f32 %v479, %v127
    %v481 = vmul.f32 %v479, %v131
    %484 = vrot.lane.b32.xlu0 %v480, 96
    %v485 = vpop.permute.xlu0 %484
    %486 = vrot.lane.b32.xlu0 %v481, 96
    %v487 = vpop.permute.xlu0 %486
    %v490 = vadd.f32 %v477, %v485
    %v491 = vadd.f32 %v478, %v487
    %v492 = vstv %s471
    %v493 = vadd.f32 %v490, %v492
    %v494 = vadd.f32 %v491, %v492
    %v495 = vstv %s465
    %v496 = vmul.f32 %v495, %v127
    %v497 = vmul.f32 %v495, %v131
    %v498 = vstv %s467
    %v499 = vmul.f32 %v498, %v127
    %v500 = vmul.f32 %v498, %v131
    %503 = vrot.lane.b32.xlu0 %v499, 96
    %v504 = vpop.permute.xlu0 %503
    %505 = vrot.lane.b32.xlu0 %v500, 96
    %v506 = vpop.permute.xlu0 %505
    %v509 = vadd.f32 %v496, %v504
    %v510 = vadd.f32 %v497, %v506
    %v511 = vstv %s475
    %v512 = vadd.f32 %v509, %v511
    %v513 = vadd.f32 %v510, %v511
    %v514 = vmul.f32 %v241, %v241
    %v515 = vmul.f32 %v245, %v245
    %518 = vrot.lane.b32.xlu0 %v241, 96
    %v519 = vpop.permute.xlu0 %518
    %520 = vrot.lane.b32.xlu0 %v245, 96
    %v521 = vpop.permute.xlu0 %520
    %v524 = vmul.f32 %v241, %v519
    %v525 = vmul.f32 %v245, %v521
    %528 = vrot.lane.b32.xlu0 %v514, 64
    %v529 = vpop.permute.xlu0 %528
    %530 = vrot.lane.b32.xlu0 %v515, 64
    %v531 = vpop.permute.xlu0 %530
    %v534 = vsel %vm202, %v241, %v529
    %v535 = vsel %vm202, %v245, %v531
    %v536 = vsel %vm271, %v534, %v529
    %v537 = vsel %vm271, %v535, %v531
    %538 = vmatprep.subr.mxu0 0.0
    %539 = vmatpush1.msra.mxu0 0.0
    %540 = vmatprep.subr.mxu0 0.0
    %541 = vmatpush1.msra.mxu0 0.0
    %542 = vmatprep.subr.mxu0 0.0
    %543 = vmatpush1.msra.mxu0 0.0
    %544 = vmatprep.subr.mxu0 0.0
    %545 = vmatpush1.msra.mxu0 0.0
    %546 = vmatprep.subr.mxu0 0.0
    %547 = vmatpush1.msra.mxu0 0.0
    %548 = vmatprep.subr.mxu0 0.0
    %549 = vmatpush1.msra.mxu0 0.0
    %550 = vmatprep.subr.mxu0 0.0
    %551 = vmatpush1.msra.mxu0 0.0
    %552 = vmatprep.subr.mxu0 0.0
    %553 = vmatpush1.msra.mxu0 0.0
    %554 = vmatprep.subr.mxu0 0.0
    %555 = vmatpush1.msra.mxu0 0.0
    %556 = vmatprep.subr.mxu0 0.0
    %557 = vmatpush1.msra.mxu0 0.0
    %558 = vmatprep.subr.mxu0 0.0
    %559 = vmatpush1.msra.mxu0 0.0
    %560 = vmatprep.subr.mxu0 0.0
    %561 = vmatpush1.msra.mxu0 0.0
    %562 = vmatprep.subr.mxu0 0.0
    %563 = vmatpush1.msra.mxu0 0.0
    %564 = vmatprep.subr.mxu0 0.0
    %565 = vmatpush1.msra.mxu0 0.0
    %566 = vmatprep.subr.mxu0 %v525
    %567 = vmatpush1.msra.mxu0 %v537
    %568 = vmatprep.subr.mxu0 %v524
    %569 = vmatpush1.msra.mxu0 %v536
    %570 = vmatprep.subr.mxu0 0.0
    %571 = vmatpush2.msra.mxu0 0.0
    %572 = vmatprep.subr.mxu0 0.0
    %573 = vmatpush2.msra.mxu0 0.0
    %574 = vmatprep.subr.mxu0 0.0
    %575 = vmatpush2.msra.mxu0 0.0
    %576 = vmatprep.subr.mxu0 0.0
    %577 = vmatpush2.msra.mxu0 0.0
    %578 = vmatprep.subr.mxu0 0.0
    %579 = vmatpush2.msra.mxu0 0.0
    %580 = vmatprep.subr.mxu0 0.0
    %581 = vmatpush2.msra.mxu0 0.0
    %582 = vmatprep.subr.mxu0 0.0
    %583 = vmatpush2.msra.mxu0 0.0
    %584 = vmatprep.subr.mxu0 0.0
    %585 = vmatpush2.msra.mxu0 0.0
    %586 = vmatprep.subr.mxu0 0.0
    %587 = vmatpush2.msra.mxu0 0.0
    %588 = vmatprep.subr.mxu0 0.0
    %589 = vmatpush2.msra.mxu0 0.0
    %590 = vmatprep.subr.mxu0 0.0
    %591 = vmatpush2.msra.mxu0 0.0
    %592 = vmatprep.subr.mxu0 0.0
    %593 = vmatpush2.msra.mxu0 0.0
    %594 = vmatprep.subr.mxu0 0.0
    %595 = vmatpush2.msra.mxu0 0.0
    %596 = vmatprep.subr.mxu0 0.0
    %597 = vmatpush2.msra.mxu0 0.0
    %598 = vmatprep.subr.mxu0 0.0
    %599 = vmatpush2.msra.mxu0 0.0
    %600 = vmatprep.subr.mxu0 0.0
    %601 = vmatpush2.msra.mxu0 0.0
    %602 = vmatprep.mubr.f32.mxu0 0.0
    %603 = vmatmul.mubr.f32.gmra.mxu0 %v276
    %v604 = vpop.f32.mrf.mxu0
    %v605 = vadd.f32 0.0, %v604
    %v606 = vpop.f32.mrf.mxu0
    %v607 = vadd.f32 0.0, %v606
    %608 = vdwg.mxu0
    %v609 = vsel %vm349, %v605, 0.0
    %610 = vadd.xlane.f32.xlu0 %v609
    %v611 = vpop.xlane.xlu0 %610
    %v612 = vrot.slane %v611, 4
    %v613 = vadd.f32 %v611, %v612
    %v614 = vrot.slane %v613, 2
    %v615 = vadd.f32 %v613, %v614
    %v616 = vrot.slane %v615, 1
    %v617 = vadd.f32 %v615, %v616
    %s618 = vtos %v617
    %s619 = smul.f32 %s618, 0.001953125
    %621 = vrot.lane.b32.xlu0 %v605, 96
    %v622 = vpop.permute.xlu0 %621
    %v624 = vsel %vm349, %v622, 0.0
    %625 = vadd.xlane.f32.xlu0 %v624
    %v626 = vpop.xlane.xlu0 %625
    %v627 = vrot.slane %v626, 4
    %v628 = vadd.f32 %v626, %v627
    %v629 = vrot.slane %v628, 2
    %v630 = vadd.f32 %v628, %v629
    %v631 = vrot.slane %v630, 1
    %v632 = vadd.f32 %v630, %v631
    %s633 = vtos %v632
    %s634 = smul.f32 %s633, 0.001953125
    %635 = vrot.lane.b32.xlu0 %v605, 64
    %v636 = vpop.permute.xlu0 %635
    %v638 = vsel %vm349, %v636, 0.0
    %639 = vadd.xlane.f32.xlu0 %v638
    %v640 = vpop.xlane.xlu0 %639
    %v641 = vrot.slane %v640, 4
    %v642 = vadd.f32 %v640, %v641
    %v643 = vrot.slane %v642, 2
    %v644 = vadd.f32 %v642, %v643
    %v645 = vrot.slane %v644, 1
    %v646 = vadd.f32 %v644, %v645
    %s647 = vtos %v646
    %s648 = smul.f32 %s647, 0.001953125
    %s649 = smul.f32 %s619, %s619
    %s650 = ssub.f32 %s648, %s649
    %s651 = sadd.f32 %s650, 1e-05
    %652 = vrot.lane.b32.xlu0 %v605, 32
    %v653 = vpop.permute.xlu0 %652
    %v655 = vsel %vm349, %v653, 0.0
    %656 = vadd.xlane.f32.xlu0 %v655
    %v657 = vpop.xlane.xlu0 %656
    %v658 = vrot.slane %v657, 4
    %v659 = vadd.f32 %v657, %v658
    %v660 = vrot.slane %v659, 2
    %v661 = vadd.f32 %v659, %v660
    %v662 = vrot.slane %v661, 1
    %v663 = vadd.f32 %v661, %v662
    %s664 = vtos %v663
    %s665 = smul.f32 %s664, 0.001953125
    %s666 = smul.f32 %s634, %s634
    %s667 = ssub.f32 %s665, %s666
    %s668 = sadd.f32 %s667, 1e-05
    %v669 = vsel %vm349, %v607, 0.0
    %670 = vadd.xlane.f32.xlu0 %v669
    %v671 = vpop.xlane.xlu0 %670
    %v672 = vrot.slane %v671, 4
    %v673 = vadd.f32 %v671, %v672
    %v674 = vrot.slane %v673, 2
    %v675 = vadd.f32 %v673, %v674
    %v676 = vrot.slane %v675, 1
    %v677 = vadd.f32 %v675, %v676
    %s678 = vtos %v677
    %s679 = smul.f32 %s678, 0.001953125
    %s680 = smul.f32 %s619, %s634
    %s681 = ssub.f32 %s679, %s680
    %s682 = smul.f32 %s651, %s668
    %s683 = smul.f32 %s681, %s681
    %s684 = ssub.f32 %s682, %s683
    %v685 = vstv %s684
    %v686 = vrsqrt.pop %v685
    %v687 = vmul.f32 %v685, %v686
    %vm688 = vcmp.eq.f32.partialorder %v685, inf
    %v689 = vsel %vm688, %v685, %v687
    %vm690 = vcmp.eq.f32.partialorder %v685, 0.0
    %v691 = vand.u32 %v685, 2147483648
    %v692 = vsel %vm690, %v691, %v689
    %s693 = vtos %v692
    %s694 = sadd.f32 %s651, %s668
    %s695 = smul.f32 %s693, 2.0
    %s696 = sadd.f32 %s694, %s695
    %v697 = vstv %s696
    %v698 = vrsqrt.pop %v697
    %v699 = vmul.f32 %v697, %v698
    %vm700 = vcmp.eq.f32.partialorder %v697, inf
    %v701 = vsel %vm700, %v697, %v699
    %vm702 = vcmp.eq.f32.partialorder %v697, 0.0
    %v703 = vand.u32 %v697, 2147483648
    %v704 = vsel %vm702, %v703, %v701
    %s705 = vtos %v704
    %s706 = smul.f32 %s693, %s705
    %v707 = vstv %s706
    %v708 = vrcp.pop %v707
    %s709 = vtos %v708
    %s710 = sadd.f32 %s668, %s693
    %s711 = smul.f32 %s710, %s709
    %s712 = sadd.f32 %s651, %s693
    %s713 = smul.f32 %s712, %s709
    %s714 = ssub.f32 0.0, %s681
    %s715 = smul.f32 %s714, %s709
    %s716 = smul.f32 %s40, %s711
    %s717 = smul.f32 %s42, %s715
    %s718 = sadd.f32 %s716, %s717
    %s719 = smul.f32 %s40, %s715
    %s720 = smul.f32 %s42, %s713
    %s721 = sadd.f32 %s719, %s720
    %s722 = smul.f32 %s42, %s711
    %s723 = smul.f32 %s41, %s715
    %s724 = sadd.f32 %s722, %s723
    %s725 = smul.f32 %s41, %s713
    %s726 = sadd.f32 %s717, %s725
    %s727 = smul.f32 %s718, %s619
    %s728 = ssub.f32 %s43, %s727
    %s729 = smul.f32 %s721, %s634
    %s730 = ssub.f32 %s728, %s729
    %s731 = smul.f32 %s724, %s619
    %s732 = ssub.f32 %s44, %s731
    %s733 = smul.f32 %s726, %s634
    %s734 = ssub.f32 %s732, %s733
    %v735 = vstv %s718
    %v736 = vmul.f32 %v735, %v241
    %v737 = vmul.f32 %v735, %v245
    %v738 = vstv %s721
    %v739 = vmul.f32 %v738, %v241
    %v740 = vmul.f32 %v738, %v245
    %743 = vrot.lane.b32.xlu0 %v739, 96
    %v744 = vpop.permute.xlu0 %743
    %745 = vrot.lane.b32.xlu0 %v740, 96
    %v746 = vpop.permute.xlu0 %745
    %v749 = vadd.f32 %v736, %v744
    %v750 = vadd.f32 %v737, %v746
    %v751 = vstv %s730
    %v752 = vadd.f32 %v749, %v751
    %v753 = vadd.f32 %v750, %v751
    %v754 = vstv %s724
    %v755 = vmul.f32 %v754, %v241
    %v756 = vmul.f32 %v754, %v245
    %v757 = vstv %s726
    %v758 = vmul.f32 %v757, %v241
    %v759 = vmul.f32 %v757, %v245
    %762 = vrot.lane.b32.xlu0 %v758, 96
    %v763 = vpop.permute.xlu0 %762
    %764 = vrot.lane.b32.xlu0 %v759, 96
    %v765 = vpop.permute.xlu0 %764
    %v768 = vadd.f32 %v755, %v763
    %v769 = vadd.f32 %v756, %v765
    %v770 = vstv %s734
    %v771 = vadd.f32 %v768, %v770
    %v772 = vadd.f32 %v769, %v770
    %v773 = vadd.f32 %v493, %v752
    %v774 = vadd.f32 %v494, %v753
    %v775 = vmul.f32 %v773, 0.5
    %v776 = vmul.f32 %v774, 0.5
    %v777 = vtanh.pop %v775
    %v778 = vtanh.pop %v776
    %v779 = vadd.f32 %v777, 1.0
    %v780 = vadd.f32 %v778, 1.0
    %v781 = vmul.f32 %v779, 0.5
    %v782 = vmul.f32 %v780, 0.5
    %v783 = vadd.f32 %v512, %v771
    %v784 = vadd.f32 %v513, %v772
    %v785 = vmul.f32 %v783, 0.5
    %v786 = vmul.f32 %v784, 0.5
    %v787 = vtanh.pop %v785
    %v788 = vtanh.pop %v786
    %v789 = vadd.f32 %v787, 1.0
    %v790 = vadd.f32 %v788, 1.0
    %v791 = vmul.f32 %v789, 0.5
    %v792 = vmul.f32 %v790, 0.5
    %793 = vrot.lane.b32.xlu0 %v241, 64
    %v794 = vpop.permute.xlu0 %793
    %795 = vrot.lane.b32.xlu0 %v245, 64
    %v796 = vpop.permute.xlu0 %795
    %801 = vrot.lane.b32.xlu0 %v524, 64
    %v802 = vpop.permute.xlu0 %801
    %803 = vrot.lane.b32.xlu0 %v525, 64
    %v804 = vpop.permute.xlu0 %803
    %v807 = vsel %vm202, %v794, %v514
    %v808 = vsel %vm202, %v796, %v515
    %v809 = vsel %vm271, %v807, %v514
    %v810 = vsel %vm271, %v808, %v515
    %811 = vmatprep.subr.mxu0 0.0
    %812 = vmatpush1.msra.mxu0 0.0
    %813 = vmatprep.subr.mxu0 0.0
    %814 = vmatpush1.msra.mxu0 0.0
    %815 = vmatprep.subr.mxu0 0.0
    %816 = vmatpush1.msra.mxu0 0.0
    %817 = vmatprep.subr.mxu0 0.0
    %818 = vmatpush1.msra.mxu0 0.0
    %819 = vmatprep.subr.mxu0 0.0
    %820 = vmatpush1.msra.mxu0 0.0
    %821 = vmatprep.subr.mxu0 0.0
    %822 = vmatpush1.msra.mxu0 0.0
    %823 = vmatprep.subr.mxu0 0.0
    %824 = vmatpush1.msra.mxu0 0.0
    %825 = vmatprep.subr.mxu0 0.0
    %826 = vmatpush1.msra.mxu0 0.0
    %827 = vmatprep.subr.mxu0 0.0
    %828 = vmatpush1.msra.mxu0 0.0
    %829 = vmatprep.subr.mxu0 0.0
    %830 = vmatpush1.msra.mxu0 0.0
    %831 = vmatprep.subr.mxu0 0.0
    %832 = vmatpush1.msra.mxu0 0.0
    %833 = vmatprep.subr.mxu0 0.0
    %834 = vmatpush1.msra.mxu0 0.0
    %835 = vmatprep.subr.mxu0 0.0
    %836 = vmatpush1.msra.mxu0 0.0
    %837 = vmatprep.subr.mxu0 0.0
    %838 = vmatpush1.msra.mxu0 0.0
    %839 = vmatprep.subr.mxu0 %v804
    %840 = vmatpush1.msra.mxu0 %v810
    %841 = vmatprep.subr.mxu0 %v802
    %842 = vmatpush1.msra.mxu0 %v809
    %843 = vmatprep.subr.mxu0 0.0
    %844 = vmatpush2.msra.mxu0 0.0
    %845 = vmatprep.subr.mxu0 0.0
    %846 = vmatpush2.msra.mxu0 0.0
    %847 = vmatprep.subr.mxu0 0.0
    %848 = vmatpush2.msra.mxu0 0.0
    %849 = vmatprep.subr.mxu0 0.0
    %850 = vmatpush2.msra.mxu0 0.0
    %851 = vmatprep.subr.mxu0 0.0
    %852 = vmatpush2.msra.mxu0 0.0
    %853 = vmatprep.subr.mxu0 0.0
    %854 = vmatpush2.msra.mxu0 0.0
    %855 = vmatprep.subr.mxu0 0.0
    %856 = vmatpush2.msra.mxu0 0.0
    %857 = vmatprep.subr.mxu0 0.0
    %858 = vmatpush2.msra.mxu0 0.0
    %859 = vmatprep.subr.mxu0 0.0
    %860 = vmatpush2.msra.mxu0 0.0
    %861 = vmatprep.subr.mxu0 0.0
    %862 = vmatpush2.msra.mxu0 0.0
    %863 = vmatprep.subr.mxu0 0.0
    %864 = vmatpush2.msra.mxu0 0.0
    %865 = vmatprep.subr.mxu0 0.0
    %866 = vmatpush2.msra.mxu0 0.0
    %867 = vmatprep.subr.mxu0 0.0
    %868 = vmatpush2.msra.mxu0 0.0
    %869 = vmatprep.subr.mxu0 0.0
    %870 = vmatpush2.msra.mxu0 0.0
    %871 = vmatprep.subr.mxu0 0.0
    %872 = vmatpush2.msra.mxu0 0.0
    %873 = vmatprep.subr.mxu0 0.0
    %874 = vmatpush2.msra.mxu0 0.0
    %875 = vmatprep.mubr.f32.mxu0 0.0
    %876 = vmatmul.mubr.f32.gmra.mxu0 %v276
    %v877 = vpop.f32.mrf.mxu0
    %v878 = vadd.f32 0.0, %v877
    %v879 = vpop.f32.mrf.mxu0
    %v880 = vadd.f32 0.0, %v879
    %881 = vdwg.mxu0
    %v882 = vsel %vm349, %v878, 0.0
    %883 = vadd.xlane.f32.xlu0 %v882
    %v884 = vpop.xlane.xlu0 %883
    %v885 = vrot.slane %v884, 4
    %v886 = vadd.f32 %v884, %v885
    %v887 = vrot.slane %v886, 2
    %v888 = vadd.f32 %v886, %v887
    %v889 = vrot.slane %v888, 1
    %v890 = vadd.f32 %v888, %v889
    %s891 = vtos %v890
    %s892 = smul.f32 %s891, 0.001953125
    %894 = vrot.lane.b32.xlu0 %v878, 96
    %v895 = vpop.permute.xlu0 %894
    %v897 = vsel %vm349, %v895, 0.0
    %898 = vadd.xlane.f32.xlu0 %v897
    %v899 = vpop.xlane.xlu0 %898
    %v900 = vrot.slane %v899, 4
    %v901 = vadd.f32 %v899, %v900
    %v902 = vrot.slane %v901, 2
    %v903 = vadd.f32 %v901, %v902
    %v904 = vrot.slane %v903, 1
    %v905 = vadd.f32 %v903, %v904
    %s906 = vtos %v905
    %s907 = smul.f32 %s906, 0.001953125
    %908 = vrot.lane.b32.xlu0 %v878, 64
    %v909 = vpop.permute.xlu0 %908
    %v911 = vsel %vm349, %v909, 0.0
    %912 = vadd.xlane.f32.xlu0 %v911
    %v913 = vpop.xlane.xlu0 %912
    %v914 = vrot.slane %v913, 4
    %v915 = vadd.f32 %v913, %v914
    %v916 = vrot.slane %v915, 2
    %v917 = vadd.f32 %v915, %v916
    %v918 = vrot.slane %v917, 1
    %v919 = vadd.f32 %v917, %v918
    %s920 = vtos %v919
    %s921 = smul.f32 %s920, 0.001953125
    %s922 = smul.f32 %s892, %s892
    %s923 = ssub.f32 %s921, %s922
    %s924 = sadd.f32 %s923, 1e-05
    %925 = vrot.lane.b32.xlu0 %v878, 32
    %v926 = vpop.permute.xlu0 %925
    %v928 = vsel %vm349, %v926, 0.0
    %929 = vadd.xlane.f32.xlu0 %v928
    %v930 = vpop.xlane.xlu0 %929
    %v931 = vrot.slane %v930, 4
    %v932 = vadd.f32 %v930, %v931
    %v933 = vrot.slane %v932, 2
    %v934 = vadd.f32 %v932, %v933
    %v935 = vrot.slane %v934, 1
    %v936 = vadd.f32 %v934, %v935
    %s937 = vtos %v936
    %s938 = smul.f32 %s937, 0.001953125
    %s939 = smul.f32 %s907, %s907
    %s940 = ssub.f32 %s938, %s939
    %s941 = sadd.f32 %s940, 1e-05
    %v942 = vsel %vm349, %v880, 0.0
    %943 = vadd.xlane.f32.xlu0 %v942
    %v944 = vpop.xlane.xlu0 %943
    %v945 = vrot.slane %v944, 4
    %v946 = vadd.f32 %v944, %v945
    %v947 = vrot.slane %v946, 2
    %v948 = vadd.f32 %v946, %v947
    %v949 = vrot.slane %v948, 1
    %v950 = vadd.f32 %v948, %v949
    %s951 = vtos %v950
    %s952 = smul.f32 %s951, 0.001953125
    %s953 = smul.f32 %s892, %s907
    %s954 = ssub.f32 %s952, %s953
    %s955 = smul.f32 %s924, %s941
    %s956 = smul.f32 %s954, %s954
    %s957 = ssub.f32 %s955, %s956
    %v958 = vstv %s957
    %v959 = vrsqrt.pop %v958
    %v960 = vmul.f32 %v958, %v959
    %vm961 = vcmp.eq.f32.partialorder %v958, inf
    %v962 = vsel %vm961, %v958, %v960
    %vm963 = vcmp.eq.f32.partialorder %v958, 0.0
    %v964 = vand.u32 %v958, 2147483648
    %v965 = vsel %vm963, %v964, %v962
    %s966 = vtos %v965
    %s967 = sadd.f32 %s924, %s941
    %s968 = smul.f32 %s966, 2.0
    %s969 = sadd.f32 %s967, %s968
    %v970 = vstv %s969
    %v971 = vrsqrt.pop %v970
    %v972 = vmul.f32 %v970, %v971
    %vm973 = vcmp.eq.f32.partialorder %v970, inf
    %v974 = vsel %vm973, %v970, %v972
    %vm975 = vcmp.eq.f32.partialorder %v970, 0.0
    %v976 = vand.u32 %v970, 2147483648
    %v977 = vsel %vm975, %v976, %v974
    %s978 = vtos %v977
    %s979 = smul.f32 %s966, %s978
    %v980 = vstv %s979
    %v981 = vrcp.pop %v980
    %s982 = vtos %v981
    %s983 = sadd.f32 %s941, %s966
    %s984 = smul.f32 %s983, %s982
    %s985 = sadd.f32 %s924, %s966
    %s986 = smul.f32 %s985, %s982
    %s987 = ssub.f32 0.0, %s954
    %s988 = smul.f32 %s987, %s982
    %s989 = smul.f32 %s40, %s984
    %s990 = smul.f32 %s42, %s988
    %s991 = sadd.f32 %s989, %s990
    %s992 = smul.f32 %s40, %s988
    %s993 = smul.f32 %s42, %s986
    %s994 = sadd.f32 %s992, %s993
    %s995 = smul.f32 %s42, %s984
    %s996 = smul.f32 %s41, %s988
    %s997 = sadd.f32 %s995, %s996
    %s998 = smul.f32 %s41, %s986
    %s999 = sadd.f32 %s990, %s998
    %s1000 = smul.f32 %s991, %s892
    %s1001 = ssub.f32 %s43, %s1000
    %s1002 = smul.f32 %s994, %s907
    %s1003 = ssub.f32 %s1001, %s1002
    %s1004 = smul.f32 %s997, %s892
    %s1005 = ssub.f32 %s44, %s1004
    %s1006 = smul.f32 %s999, %s907
    %s1007 = ssub.f32 %s1005, %s1006
    %v1008 = vstv %s991
    %v1009 = vmul.f32 %v1008, %v241
    %v1010 = vmul.f32 %v1008, %v245
    %v1011 = vstv %s994
    %v1012 = vmul.f32 %v1011, %v241
    %v1013 = vmul.f32 %v1011, %v245
    %1016 = vrot.lane.b32.xlu0 %v1012, 96
    %v1017 = vpop.permute.xlu0 %1016
    %1018 = vrot.lane.b32.xlu0 %v1013, 96
    %v1019 = vpop.permute.xlu0 %1018
    %v1022 = vadd.f32 %v1009, %v1017
    %v1023 = vadd.f32 %v1010, %v1019
    %v1024 = vstv %s1003
    %v1025 = vadd.f32 %v1022, %v1024
    %v1026 = vadd.f32 %v1023, %v1024
    %v1027 = vstv %s997
    %v1028 = vmul.f32 %v1027, %v241
    %v1029 = vmul.f32 %v1027, %v245
    %v1030 = vstv %s999
    %v1031 = vmul.f32 %v1030, %v241
    %v1032 = vmul.f32 %v1030, %v245
    %1035 = vrot.lane.b32.xlu0 %v1031, 96
    %v1036 = vpop.permute.xlu0 %1035
    %1037 = vrot.lane.b32.xlu0 %v1032, 96
    %v1038 = vpop.permute.xlu0 %1037
    %v1041 = vadd.f32 %v1028, %v1036
    %v1042 = vadd.f32 %v1029, %v1038
    %v1043 = vstv %s1007
    %v1044 = vadd.f32 %v1041, %v1043
    %v1045 = vadd.f32 %v1042, %v1043
    %1046 = vrot.lane.b32.xlu0 %v127, 64
    %v1047 = vpop.permute.xlu0 %1046
    %1048 = vrot.lane.b32.xlu0 %v131, 64
    %v1049 = vpop.permute.xlu0 %1048
    %1054 = vrot.lane.b32.xlu0 %v259, 64
    %v1055 = vpop.permute.xlu0 %1054
    %1056 = vrot.lane.b32.xlu0 %v260, 64
    %v1057 = vpop.permute.xlu0 %1056
    %v1060 = vsel %vm202, %v1047, %v249
    %v1061 = vsel %vm202, %v1049, %v250
    %v1062 = vsel %vm271, %v1060, %v249
    %v1063 = vsel %vm271, %v1061, %v250
    %1064 = vmatprep.subr.mxu0 0.0
    %1065 = vmatpush1.msra.mxu0 0.0
    %1066 = vmatprep.subr.mxu0 0.0
    %1067 = vmatpush1.msra.mxu0 0.0
    %1068 = vmatprep.subr.mxu0 0.0
    %1069 = vmatpush1.msra.mxu0 0.0
    %1070 = vmatprep.subr.mxu0 0.0
    %1071 = vmatpush1.msra.mxu0 0.0
    %1072 = vmatprep.subr.mxu0 0.0
    %1073 = vmatpush1.msra.mxu0 0.0
    %1074 = vmatprep.subr.mxu0 0.0
    %1075 = vmatpush1.msra.mxu0 0.0
    %1076 = vmatprep.subr.mxu0 0.0
    %1077 = vmatpush1.msra.mxu0 0.0
    %1078 = vmatprep.subr.mxu0 0.0
    %1079 = vmatpush1.msra.mxu0 0.0
    %1080 = vmatprep.subr.mxu0 0.0
    %1081 = vmatpush1.msra.mxu0 0.0
    %1082 = vmatprep.subr.mxu0 0.0
    %1083 = vmatpush1.msra.mxu0 0.0
    %1084 = vmatprep.subr.mxu0 0.0
    %1085 = vmatpush1.msra.mxu0 0.0
    %1086 = vmatprep.subr.mxu0 0.0
    %1087 = vmatpush1.msra.mxu0 0.0
    %1088 = vmatprep.subr.mxu0 0.0
    %1089 = vmatpush1.msra.mxu0 0.0
    %1090 = vmatprep.subr.mxu0 0.0
    %1091 = vmatpush1.msra.mxu0 0.0
    %1092 = vmatprep.subr.mxu0 %v1057
    %1093 = vmatpush1.msra.mxu0 %v1063
    %1094 = vmatprep.subr.mxu0 %v1055
    %1095 = vmatpush1.msra.mxu0 %v1062
    %1096 = vmatprep.subr.mxu0 0.0
    %1097 = vmatpush2.msra.mxu0 0.0
    %1098 = vmatprep.subr.mxu0 0.0
    %1099 = vmatpush2.msra.mxu0 0.0
    %1100 = vmatprep.subr.mxu0 0.0
    %1101 = vmatpush2.msra.mxu0 0.0
    %1102 = vmatprep.subr.mxu0 0.0
    %1103 = vmatpush2.msra.mxu0 0.0
    %1104 = vmatprep.subr.mxu0 0.0
    %1105 = vmatpush2.msra.mxu0 0.0
    %1106 = vmatprep.subr.mxu0 0.0
    %1107 = vmatpush2.msra.mxu0 0.0
    %1108 = vmatprep.subr.mxu0 0.0
    %1109 = vmatpush2.msra.mxu0 0.0
    %1110 = vmatprep.subr.mxu0 0.0
    %1111 = vmatpush2.msra.mxu0 0.0
    %1112 = vmatprep.subr.mxu0 0.0
    %1113 = vmatpush2.msra.mxu0 0.0
    %1114 = vmatprep.subr.mxu0 0.0
    %1115 = vmatpush2.msra.mxu0 0.0
    %1116 = vmatprep.subr.mxu0 0.0
    %1117 = vmatpush2.msra.mxu0 0.0
    %1118 = vmatprep.subr.mxu0 0.0
    %1119 = vmatpush2.msra.mxu0 0.0
    %1120 = vmatprep.subr.mxu0 0.0
    %1121 = vmatpush2.msra.mxu0 0.0
    %1122 = vmatprep.subr.mxu0 0.0
    %1123 = vmatpush2.msra.mxu0 0.0
    %1124 = vmatprep.subr.mxu0 0.0
    %1125 = vmatpush2.msra.mxu0 0.0
    %1126 = vmatprep.subr.mxu0 0.0
    %1127 = vmatpush2.msra.mxu0 0.0
    %1128 = vmatprep.mubr.f32.mxu0 0.0
    %1129 = vmatmul.mubr.f32.gmra.mxu0 %v276
    %v1130 = vpop.f32.mrf.mxu0
    %v1131 = vadd.f32 0.0, %v1130
    %v1132 = vpop.f32.mrf.mxu0
    %v1133 = vadd.f32 0.0, %v1132
    %1134 = vdwg.mxu0
    %v1135 = vsel %vm349, %v1131, 0.0
    %1136 = vadd.xlane.f32.xlu0 %v1135
    %v1137 = vpop.xlane.xlu0 %1136
    %v1138 = vrot.slane %v1137, 4
    %v1139 = vadd.f32 %v1137, %v1138
    %v1140 = vrot.slane %v1139, 2
    %v1141 = vadd.f32 %v1139, %v1140
    %v1142 = vrot.slane %v1141, 1
    %v1143 = vadd.f32 %v1141, %v1142
    %s1144 = vtos %v1143
    %s1145 = smul.f32 %s1144, 0.001953125
    %1147 = vrot.lane.b32.xlu0 %v1131, 96
    %v1148 = vpop.permute.xlu0 %1147
    %v1150 = vsel %vm349, %v1148, 0.0
    %1151 = vadd.xlane.f32.xlu0 %v1150
    %v1152 = vpop.xlane.xlu0 %1151
    %v1153 = vrot.slane %v1152, 4
    %v1154 = vadd.f32 %v1152, %v1153
    %v1155 = vrot.slane %v1154, 2
    %v1156 = vadd.f32 %v1154, %v1155
    %v1157 = vrot.slane %v1156, 1
    %v1158 = vadd.f32 %v1156, %v1157
    %s1159 = vtos %v1158
    %s1160 = smul.f32 %s1159, 0.001953125
    %1161 = vrot.lane.b32.xlu0 %v1131, 64
    %v1162 = vpop.permute.xlu0 %1161
    %v1164 = vsel %vm349, %v1162, 0.0
    %1165 = vadd.xlane.f32.xlu0 %v1164
    %v1166 = vpop.xlane.xlu0 %1165
    %v1167 = vrot.slane %v1166, 4
    %v1168 = vadd.f32 %v1166, %v1167
    %v1169 = vrot.slane %v1168, 2
    %v1170 = vadd.f32 %v1168, %v1169
    %v1171 = vrot.slane %v1170, 1
    %v1172 = vadd.f32 %v1170, %v1171
    %s1173 = vtos %v1172
    %s1174 = smul.f32 %s1173, 0.001953125
    %s1175 = smul.f32 %s1145, %s1145
    %s1176 = ssub.f32 %s1174, %s1175
    %s1177 = sadd.f32 %s1176, 1e-05
    %1178 = vrot.lane.b32.xlu0 %v1131, 32
    %v1179 = vpop.permute.xlu0 %1178
    %v1181 = vsel %vm349, %v1179, 0.0
    %1182 = vadd.xlane.f32.xlu0 %v1181
    %v1183 = vpop.xlane.xlu0 %1182
    %v1184 = vrot.slane %v1183, 4
    %v1185 = vadd.f32 %v1183, %v1184
    %v1186 = vrot.slane %v1185, 2
    %v1187 = vadd.f32 %v1185, %v1186
    %v1188 = vrot.slane %v1187, 1
    %v1189 = vadd.f32 %v1187, %v1188
    %s1190 = vtos %v1189
    %s1191 = smul.f32 %s1190, 0.001953125
    %s1192 = smul.f32 %s1160, %s1160
    %s1193 = ssub.f32 %s1191, %s1192
    %s1194 = sadd.f32 %s1193, 1e-05
    %v1195 = vsel %vm349, %v1133, 0.0
    %1196 = vadd.xlane.f32.xlu0 %v1195
    %v1197 = vpop.xlane.xlu0 %1196
    %v1198 = vrot.slane %v1197, 4
    %v1199 = vadd.f32 %v1197, %v1198
    %v1200 = vrot.slane %v1199, 2
    %v1201 = vadd.f32 %v1199, %v1200
    %v1202 = vrot.slane %v1201, 1
    %v1203 = vadd.f32 %v1201, %v1202
    %s1204 = vtos %v1203
    %s1205 = smul.f32 %s1204, 0.001953125
    %s1206 = smul.f32 %s1145, %s1160
    %s1207 = ssub.f32 %s1205, %s1206
    %s1208 = smul.f32 %s1177, %s1194
    %s1209 = smul.f32 %s1207, %s1207
    %s1210 = ssub.f32 %s1208, %s1209
    %v1211 = vstv %s1210
    %v1212 = vrsqrt.pop %v1211
    %v1213 = vmul.f32 %v1211, %v1212
    %vm1214 = vcmp.eq.f32.partialorder %v1211, inf
    %v1215 = vsel %vm1214, %v1211, %v1213
    %vm1216 = vcmp.eq.f32.partialorder %v1211, 0.0
    %v1217 = vand.u32 %v1211, 2147483648
    %v1218 = vsel %vm1216, %v1217, %v1215
    %s1219 = vtos %v1218
    %s1220 = sadd.f32 %s1177, %s1194
    %s1221 = smul.f32 %s1219, 2.0
    %s1222 = sadd.f32 %s1220, %s1221
    %v1223 = vstv %s1222
    %v1224 = vrsqrt.pop %v1223
    %v1225 = vmul.f32 %v1223, %v1224
    %vm1226 = vcmp.eq.f32.partialorder %v1223, inf
    %v1227 = vsel %vm1226, %v1223, %v1225
    %vm1228 = vcmp.eq.f32.partialorder %v1223, 0.0
    %v1229 = vand.u32 %v1223, 2147483648
    %v1230 = vsel %vm1228, %v1229, %v1227
    %s1231 = vtos %v1230
    %s1232 = smul.f32 %s1219, %s1231
    %v1233 = vstv %s1232
    %v1234 = vrcp.pop %v1233
    %s1235 = vtos %v1234
    %s1236 = sadd.f32 %s1194, %s1219
    %s1237 = smul.f32 %s1236, %s1235
    %s1238 = sadd.f32 %s1177, %s1219
    %s1239 = smul.f32 %s1238, %s1235
    %s1240 = ssub.f32 0.0, %s1207
    %s1241 = smul.f32 %s1240, %s1235
    %s1242 = smul.f32 %s40, %s1237
    %s1243 = smul.f32 %s42, %s1241
    %s1244 = sadd.f32 %s1242, %s1243
    %s1245 = smul.f32 %s40, %s1241
    %s1246 = smul.f32 %s42, %s1239
    %s1247 = sadd.f32 %s1245, %s1246
    %s1248 = smul.f32 %s42, %s1237
    %s1249 = smul.f32 %s41, %s1241
    %s1250 = sadd.f32 %s1248, %s1249
    %s1251 = smul.f32 %s41, %s1239
    %s1252 = sadd.f32 %s1243, %s1251
    %s1253 = smul.f32 %s1244, %s1145
    %s1254 = ssub.f32 %s43, %s1253
    %s1255 = smul.f32 %s1247, %s1160
    %s1256 = ssub.f32 %s1254, %s1255
    %s1257 = smul.f32 %s1250, %s1145
    %s1258 = ssub.f32 %s44, %s1257
    %s1259 = smul.f32 %s1252, %s1160
    %s1260 = ssub.f32 %s1258, %s1259
    %v1261 = vstv %s1244
    %v1262 = vmul.f32 %v1261, %v127
    %v1263 = vmul.f32 %v1261, %v131
    %v1264 = vstv %s1247
    %v1265 = vmul.f32 %v1264, %v127
    %v1266 = vmul.f32 %v1264, %v131
    %1269 = vrot.lane.b32.xlu0 %v1265, 96
    %v1270 = vpop.permute.xlu0 %1269
    %1271 = vrot.lane.b32.xlu0 %v1266, 96
    %v1272 = vpop.permute.xlu0 %1271
    %v1275 = vadd.f32 %v1262, %v1270
    %v1276 = vadd.f32 %v1263, %v1272
    %v1277 = vstv %s1256
    %v1278 = vadd.f32 %v1275, %v1277
    %v1279 = vadd.f32 %v1276, %v1277
    %v1280 = vstv %s1250
    %v1281 = vmul.f32 %v1280, %v127
    %v1282 = vmul.f32 %v1280, %v131
    %v1283 = vstv %s1252
    %v1284 = vmul.f32 %v1283, %v127
    %v1285 = vmul.f32 %v1283, %v131
    %1288 = vrot.lane.b32.xlu0 %v1284, 96
    %v1289 = vpop.permute.xlu0 %1288
    %1290 = vrot.lane.b32.xlu0 %v1285, 96
    %v1291 = vpop.permute.xlu0 %1290
    %v1294 = vadd.f32 %v1281, %v1289
    %v1295 = vadd.f32 %v1282, %v1291
    %v1296 = vstv %s1260
    %v1297 = vadd.f32 %v1294, %v1296
    %v1298 = vadd.f32 %v1295, %v1296
    %v1299 = vadd.f32 %v1025, %v1278
    %v1300 = vadd.f32 %v1026, %v1279
    %v1301 = vmul.f32 %v1299, 0.5
    %v1302 = vmul.f32 %v1300, 0.5
    %v1303 = vtanh.pop %v1301
    %v1304 = vtanh.pop %v1302
    %v1305 = vadd.f32 %v1303, 1.0
    %v1306 = vadd.f32 %v1304, 1.0
    %v1307 = vmul.f32 %v1305, 0.5
    %v1308 = vmul.f32 %v1306, 0.5
    %v1309 = vadd.f32 %v1044, %v1297
    %v1310 = vadd.f32 %v1045, %v1298
    %v1311 = vmul.f32 %v1309, 0.5
    %v1312 = vmul.f32 %v1310, 0.5
    %v1313 = vtanh.pop %v1311
    %v1314 = vtanh.pop %v1312
    %v1315 = vadd.f32 %v1313, 1.0
    %v1316 = vadd.f32 %v1314, 1.0
    %v1317 = vmul.f32 %v1315, 0.5
    %v1318 = vmul.f32 %v1316, 0.5
    %v1319 = vmul.f32 %v243, %v243
    %v1320 = vmul.f32 %v247, %v247
    %1323 = vrot.lane.b32.xlu0 %v243, 96
    %v1324 = vpop.permute.xlu0 %1323
    %1325 = vrot.lane.b32.xlu0 %v247, 96
    %v1326 = vpop.permute.xlu0 %1325
    %v1329 = vmul.f32 %v243, %v1324
    %v1330 = vmul.f32 %v247, %v1326
    %1333 = vrot.lane.b32.xlu0 %v1319, 64
    %v1334 = vpop.permute.xlu0 %1333
    %1335 = vrot.lane.b32.xlu0 %v1320, 64
    %v1336 = vpop.permute.xlu0 %1335
    %v1339 = vsel %vm202, %v243, %v1334
    %v1340 = vsel %vm202, %v247, %v1336
    %v1341 = vsel %vm271, %v1339, %v1334
    %v1342 = vsel %vm271, %v1340, %v1336
    %1343 = vmatprep.subr.mxu0 0.0
    %1344 = vmatpush1.msra.mxu0 0.0
    %1345 = vmatprep.subr.mxu0 0.0
    %1346 = vmatpush1.msra.mxu0 0.0
    %1347 = vmatprep.subr.mxu0 0.0
    %1348 = vmatpush1.msra.mxu0 0.0
    %1349 = vmatprep.subr.mxu0 0.0
    %1350 = vmatpush1.msra.mxu0 0.0
    %1351 = vmatprep.subr.mxu0 0.0
    %1352 = vmatpush1.msra.mxu0 0.0
    %1353 = vmatprep.subr.mxu0 0.0
    %1354 = vmatpush1.msra.mxu0 0.0
    %1355 = vmatprep.subr.mxu0 0.0
    %1356 = vmatpush1.msra.mxu0 0.0
    %1357 = vmatprep.subr.mxu0 0.0
    %1358 = vmatpush1.msra.mxu0 0.0
    %1359 = vmatprep.subr.mxu0 0.0
    %1360 = vmatpush1.msra.mxu0 0.0
    %1361 = vmatprep.subr.mxu0 0.0
    %1362 = vmatpush1.msra.mxu0 0.0
    %1363 = vmatprep.subr.mxu0 0.0
    %1364 = vmatpush1.msra.mxu0 0.0
    %1365 = vmatprep.subr.mxu0 0.0
    %1366 = vmatpush1.msra.mxu0 0.0
    %1367 = vmatprep.subr.mxu0 0.0
    %1368 = vmatpush1.msra.mxu0 0.0
    %1369 = vmatprep.subr.mxu0 0.0
    %1370 = vmatpush1.msra.mxu0 0.0
    %1371 = vmatprep.subr.mxu0 %v1330
    %1372 = vmatpush1.msra.mxu0 %v1342
    %1373 = vmatprep.subr.mxu0 %v1329
    %1374 = vmatpush1.msra.mxu0 %v1341
    %1375 = vmatprep.subr.mxu0 0.0
    %1376 = vmatpush2.msra.mxu0 0.0
    %1377 = vmatprep.subr.mxu0 0.0
    %1378 = vmatpush2.msra.mxu0 0.0
    %1379 = vmatprep.subr.mxu0 0.0
    %1380 = vmatpush2.msra.mxu0 0.0
    %1381 = vmatprep.subr.mxu0 0.0
    %1382 = vmatpush2.msra.mxu0 0.0
    %1383 = vmatprep.subr.mxu0 0.0
    %1384 = vmatpush2.msra.mxu0 0.0
    %1385 = vmatprep.subr.mxu0 0.0
    %1386 = vmatpush2.msra.mxu0 0.0
    %1387 = vmatprep.subr.mxu0 0.0
    %1388 = vmatpush2.msra.mxu0 0.0
    %1389 = vmatprep.subr.mxu0 0.0
    %1390 = vmatpush2.msra.mxu0 0.0
    %1391 = vmatprep.subr.mxu0 0.0
    %1392 = vmatpush2.msra.mxu0 0.0
    %1393 = vmatprep.subr.mxu0 0.0
    %1394 = vmatpush2.msra.mxu0 0.0
    %1395 = vmatprep.subr.mxu0 0.0
    %1396 = vmatpush2.msra.mxu0 0.0
    %1397 = vmatprep.subr.mxu0 0.0
    %1398 = vmatpush2.msra.mxu0 0.0
    %1399 = vmatprep.subr.mxu0 0.0
    %1400 = vmatpush2.msra.mxu0 0.0
    %1401 = vmatprep.subr.mxu0 0.0
    %1402 = vmatpush2.msra.mxu0 0.0
    %1403 = vmatprep.subr.mxu0 0.0
    %1404 = vmatpush2.msra.mxu0 0.0
    %1405 = vmatprep.subr.mxu0 0.0
    %1406 = vmatpush2.msra.mxu0 0.0
    %1407 = vmatprep.mubr.f32.mxu0 0.0
    %1408 = vmatmul.mubr.f32.gmra.mxu0 %v276
    %v1409 = vpop.f32.mrf.mxu0
    %v1410 = vadd.f32 0.0, %v1409
    %v1411 = vpop.f32.mrf.mxu0
    %v1412 = vadd.f32 0.0, %v1411
    %1413 = vdwg.mxu0
    %v1414 = vsel %vm349, %v1410, 0.0
    %1415 = vadd.xlane.f32.xlu0 %v1414
    %v1416 = vpop.xlane.xlu0 %1415
    %v1417 = vrot.slane %v1416, 4
    %v1418 = vadd.f32 %v1416, %v1417
    %v1419 = vrot.slane %v1418, 2
    %v1420 = vadd.f32 %v1418, %v1419
    %v1421 = vrot.slane %v1420, 1
    %v1422 = vadd.f32 %v1420, %v1421
    %s1423 = vtos %v1422
    %s1424 = smul.f32 %s1423, 0.001953125
    %1426 = vrot.lane.b32.xlu0 %v1410, 96
    %v1427 = vpop.permute.xlu0 %1426
    %v1429 = vsel %vm349, %v1427, 0.0
    %1430 = vadd.xlane.f32.xlu0 %v1429
    %v1431 = vpop.xlane.xlu0 %1430
    %v1432 = vrot.slane %v1431, 4
    %v1433 = vadd.f32 %v1431, %v1432
    %v1434 = vrot.slane %v1433, 2
    %v1435 = vadd.f32 %v1433, %v1434
    %v1436 = vrot.slane %v1435, 1
    %v1437 = vadd.f32 %v1435, %v1436
    %s1438 = vtos %v1437
    %s1439 = smul.f32 %s1438, 0.001953125
    %1440 = vrot.lane.b32.xlu0 %v1410, 64
    %v1441 = vpop.permute.xlu0 %1440
    %v1443 = vsel %vm349, %v1441, 0.0
    %1444 = vadd.xlane.f32.xlu0 %v1443
    %v1445 = vpop.xlane.xlu0 %1444
    %v1446 = vrot.slane %v1445, 4
    %v1447 = vadd.f32 %v1445, %v1446
    %v1448 = vrot.slane %v1447, 2
    %v1449 = vadd.f32 %v1447, %v1448
    %v1450 = vrot.slane %v1449, 1
    %v1451 = vadd.f32 %v1449, %v1450
    %s1452 = vtos %v1451
    %s1453 = smul.f32 %s1452, 0.001953125
    %s1454 = smul.f32 %s1424, %s1424
    %s1455 = ssub.f32 %s1453, %s1454
    %s1456 = sadd.f32 %s1455, 1e-05
    %1457 = vrot.lane.b32.xlu0 %v1410, 32
    %v1458 = vpop.permute.xlu0 %1457
    %v1460 = vsel %vm349, %v1458, 0.0
    %1461 = vadd.xlane.f32.xlu0 %v1460
    %v1462 = vpop.xlane.xlu0 %1461
    %v1463 = vrot.slane %v1462, 4
    %v1464 = vadd.f32 %v1462, %v1463
    %v1465 = vrot.slane %v1464, 2
    %v1466 = vadd.f32 %v1464, %v1465
    %v1467 = vrot.slane %v1466, 1
    %v1468 = vadd.f32 %v1466, %v1467
    %s1469 = vtos %v1468
    %s1470 = smul.f32 %s1469, 0.001953125
    %s1471 = smul.f32 %s1439, %s1439
    %s1472 = ssub.f32 %s1470, %s1471
    %s1473 = sadd.f32 %s1472, 1e-05
    %v1474 = vsel %vm349, %v1412, 0.0
    %1475 = vadd.xlane.f32.xlu0 %v1474
    %v1476 = vpop.xlane.xlu0 %1475
    %v1477 = vrot.slane %v1476, 4
    %v1478 = vadd.f32 %v1476, %v1477
    %v1479 = vrot.slane %v1478, 2
    %v1480 = vadd.f32 %v1478, %v1479
    %v1481 = vrot.slane %v1480, 1
    %v1482 = vadd.f32 %v1480, %v1481
    %s1483 = vtos %v1482
    %s1484 = smul.f32 %s1483, 0.001953125
    %s1485 = smul.f32 %s1424, %s1439
    %s1486 = ssub.f32 %s1484, %s1485
    %s1487 = smul.f32 %s1456, %s1473
    %s1488 = smul.f32 %s1486, %s1486
    %s1489 = ssub.f32 %s1487, %s1488
    %v1490 = vstv %s1489
    %v1491 = vrsqrt.pop %v1490
    %v1492 = vmul.f32 %v1490, %v1491
    %vm1493 = vcmp.eq.f32.partialorder %v1490, inf
    %v1494 = vsel %vm1493, %v1490, %v1492
    %vm1495 = vcmp.eq.f32.partialorder %v1490, 0.0
    %v1496 = vand.u32 %v1490, 2147483648
    %v1497 = vsel %vm1495, %v1496, %v1494
    %s1498 = vtos %v1497
    %s1499 = sadd.f32 %s1456, %s1473
    %s1500 = smul.f32 %s1498, 2.0
    %s1501 = sadd.f32 %s1499, %s1500
    %v1502 = vstv %s1501
    %v1503 = vrsqrt.pop %v1502
    %v1504 = vmul.f32 %v1502, %v1503
    %vm1505 = vcmp.eq.f32.partialorder %v1502, inf
    %v1506 = vsel %vm1505, %v1502, %v1504
    %vm1507 = vcmp.eq.f32.partialorder %v1502, 0.0
    %v1508 = vand.u32 %v1502, 2147483648
    %v1509 = vsel %vm1507, %v1508, %v1506
    %s1510 = vtos %v1509
    %s1511 = smul.f32 %s1498, %s1510
    %v1512 = vstv %s1511
    %v1513 = vrcp.pop %v1512
    %s1514 = vtos %v1513
    %s1515 = sadd.f32 %s1473, %s1498
    %s1516 = smul.f32 %s1515, %s1514
    %s1517 = sadd.f32 %s1456, %s1498
    %s1518 = smul.f32 %s1517, %s1514
    %s1519 = ssub.f32 0.0, %s1486
    %s1520 = smul.f32 %s1519, %s1514
    %s1521 = smul.f32 %s40, %s1516
    %s1522 = smul.f32 %s42, %s1520
    %s1523 = sadd.f32 %s1521, %s1522
    %s1524 = smul.f32 %s40, %s1520
    %s1525 = smul.f32 %s42, %s1518
    %s1526 = sadd.f32 %s1524, %s1525
    %s1527 = smul.f32 %s42, %s1516
    %s1528 = smul.f32 %s41, %s1520
    %s1529 = sadd.f32 %s1527, %s1528
    %s1530 = smul.f32 %s41, %s1518
    %s1531 = sadd.f32 %s1522, %s1530
    %s1532 = smul.f32 %s1523, %s1424
    %s1533 = ssub.f32 %s43, %s1532
    %s1534 = smul.f32 %s1526, %s1439
    %s1535 = ssub.f32 %s1533, %s1534
    %s1536 = smul.f32 %s1529, %s1424
    %s1537 = ssub.f32 %s44, %s1536
    %s1538 = smul.f32 %s1531, %s1439
    %s1539 = ssub.f32 %s1537, %s1538
    %v1540 = vstv %s1523
    %v1541 = vmul.f32 %v1540, %v243
    %v1542 = vmul.f32 %v1540, %v247
    %v1543 = vstv %s1526
    %v1544 = vmul.f32 %v1543, %v243
    %v1545 = vmul.f32 %v1543, %v247
    %1548 = vrot.lane.b32.xlu0 %v1544, 96
    %v1549 = vpop.permute.xlu0 %1548
    %1550 = vrot.lane.b32.xlu0 %v1545, 96
    %v1551 = vpop.permute.xlu0 %1550
    %v1554 = vadd.f32 %v1541, %v1549
    %v1555 = vadd.f32 %v1542, %v1551
    %v1556 = vstv %s1535
    %v1557 = vadd.f32 %v1554, %v1556
    %v1558 = vadd.f32 %v1555, %v1556
    %v1559 = vstv %s1529
    %v1560 = vmul.f32 %v1559, %v243
    %v1561 = vmul.f32 %v1559, %v247
    %v1562 = vstv %s1531
    %v1563 = vmul.f32 %v1562, %v243
    %v1564 = vmul.f32 %v1562, %v247
    %1567 = vrot.lane.b32.xlu0 %v1563, 96
    %v1568 = vpop.permute.xlu0 %1567
    %1569 = vrot.lane.b32.xlu0 %v1564, 96
    %v1570 = vpop.permute.xlu0 %1569
    %v1573 = vadd.f32 %v1560, %v1568
    %v1574 = vadd.f32 %v1561, %v1570
    %v1575 = vstv %s1539
    %v1576 = vadd.f32 %v1573, %v1575
    %v1577 = vadd.f32 %v1574, %v1575
    %v1578 = vmul.f32 %v781, %v1557
    %v1579 = vmul.f32 %v782, %v1558
    %v1580 = vmul.f32 %v791, %v1576
    %v1581 = vmul.f32 %v792, %v1577
    %v1582 = vsub.f32 %v1578, %v1580
    %v1583 = vsub.f32 %v1579, %v1581
    %v1584 = vmul.f32 %v781, %v1576
    %v1585 = vmul.f32 %v782, %v1577
    %v1586 = vmul.f32 %v791, %v1557
    %v1587 = vmul.f32 %v792, %v1558
    %v1588 = vadd.f32 %v1584, %v1586
    %v1589 = vadd.f32 %v1585, %v1587
    %v1590 = vmul.f32 %v129, %v129
    %v1591 = vmul.f32 %v133, %v133
    %1594 = vrot.lane.b32.xlu0 %v129, 96
    %v1595 = vpop.permute.xlu0 %1594
    %1596 = vrot.lane.b32.xlu0 %v133, 96
    %v1597 = vpop.permute.xlu0 %1596
    %v1600 = vmul.f32 %v129, %v1595
    %v1601 = vmul.f32 %v133, %v1597
    %1604 = vrot.lane.b32.xlu0 %v1590, 64
    %v1605 = vpop.permute.xlu0 %1604
    %1606 = vrot.lane.b32.xlu0 %v1591, 64
    %v1607 = vpop.permute.xlu0 %1606
    %v1610 = vsel %vm202, %v129, %v1605
    %v1611 = vsel %vm202, %v133, %v1607
    %v1612 = vsel %vm271, %v1610, %v1605
    %v1613 = vsel %vm271, %v1611, %v1607
    %1614 = vmatprep.subr.mxu0 0.0
    %1615 = vmatpush1.msra.mxu0 0.0
    %1616 = vmatprep.subr.mxu0 0.0
    %1617 = vmatpush1.msra.mxu0 0.0
    %1618 = vmatprep.subr.mxu0 0.0
    %1619 = vmatpush1.msra.mxu0 0.0
    %1620 = vmatprep.subr.mxu0 0.0
    %1621 = vmatpush1.msra.mxu0 0.0
    %1622 = vmatprep.subr.mxu0 0.0
    %1623 = vmatpush1.msra.mxu0 0.0
    %1624 = vmatprep.subr.mxu0 0.0
    %1625 = vmatpush1.msra.mxu0 0.0
    %1626 = vmatprep.subr.mxu0 0.0
    %1627 = vmatpush1.msra.mxu0 0.0
    %1628 = vmatprep.subr.mxu0 0.0
    %1629 = vmatpush1.msra.mxu0 0.0
    %1630 = vmatprep.subr.mxu0 0.0
    %1631 = vmatpush1.msra.mxu0 0.0
    %1632 = vmatprep.subr.mxu0 0.0
    %1633 = vmatpush1.msra.mxu0 0.0
    %1634 = vmatprep.subr.mxu0 0.0
    %1635 = vmatpush1.msra.mxu0 0.0
    %1636 = vmatprep.subr.mxu0 0.0
    %1637 = vmatpush1.msra.mxu0 0.0
    %1638 = vmatprep.subr.mxu0 0.0
    %1639 = vmatpush1.msra.mxu0 0.0
    %1640 = vmatprep.subr.mxu0 0.0
    %1641 = vmatpush1.msra.mxu0 0.0
    %1642 = vmatprep.subr.mxu0 %v1601
    %1643 = vmatpush1.msra.mxu0 %v1613
    %1644 = vmatprep.subr.mxu0 %v1600
    %1645 = vmatpush1.msra.mxu0 %v1612
    %1646 = vmatprep.subr.mxu0 0.0
    %1647 = vmatpush2.msra.mxu0 0.0
    %1648 = vmatprep.subr.mxu0 0.0
    %1649 = vmatpush2.msra.mxu0 0.0
    %1650 = vmatprep.subr.mxu0 0.0
    %1651 = vmatpush2.msra.mxu0 0.0
    %1652 = vmatprep.subr.mxu0 0.0
    %1653 = vmatpush2.msra.mxu0 0.0
    %1654 = vmatprep.subr.mxu0 0.0
    %1655 = vmatpush2.msra.mxu0 0.0
    %1656 = vmatprep.subr.mxu0 0.0
    %1657 = vmatpush2.msra.mxu0 0.0
    %1658 = vmatprep.subr.mxu0 0.0
    %1659 = vmatpush2.msra.mxu0 0.0
    %1660 = vmatprep.subr.mxu0 0.0
    %1661 = vmatpush2.msra.mxu0 0.0
    %1662 = vmatprep.subr.mxu0 0.0
    %1663 = vmatpush2.msra.mxu0 0.0
    %1664 = vmatprep.subr.mxu0 0.0
    %1665 = vmatpush2.msra.mxu0 0.0
    %1666 = vmatprep.subr.mxu0 0.0
    %1667 = vmatpush2.msra.mxu0 0.0
    %1668 = vmatprep.subr.mxu0 0.0
    %1669 = vmatpush2.msra.mxu0 0.0
    %1670 = vmatprep.subr.mxu0 0.0
    %1671 = vmatpush2.msra.mxu0 0.0
    %1672 = vmatprep.subr.mxu0 0.0
    %1673 = vmatpush2.msra.mxu0 0.0
    %1674 = vmatprep.subr.mxu0 0.0
    %1675 = vmatpush2.msra.mxu0 0.0
    %1676 = vmatprep.subr.mxu0 0.0
    %1677 = vmatpush2.msra.mxu0 0.0
    %1678 = vmatprep.mubr.f32.mxu0 0.0
    %1679 = vmatmul.mubr.f32.gmra.mxu0 %v276
    %v1680 = vpop.f32.mrf.mxu0
    %v1681 = vadd.f32 0.0, %v1680
    %v1682 = vpop.f32.mrf.mxu0
    %v1683 = vadd.f32 0.0, %v1682
    %1684 = vdwg.mxu0
    %v1685 = vsel %vm349, %v1681, 0.0
    %1686 = vadd.xlane.f32.xlu0 %v1685
    %v1687 = vpop.xlane.xlu0 %1686
    %v1688 = vrot.slane %v1687, 4
    %v1689 = vadd.f32 %v1687, %v1688
    %v1690 = vrot.slane %v1689, 2
    %v1691 = vadd.f32 %v1689, %v1690
    %v1692 = vrot.slane %v1691, 1
    %v1693 = vadd.f32 %v1691, %v1692
    %s1694 = vtos %v1693
    %s1695 = smul.f32 %s1694, 0.001953125
    %1697 = vrot.lane.b32.xlu0 %v1681, 96
    %v1698 = vpop.permute.xlu0 %1697
    %v1700 = vsel %vm349, %v1698, 0.0
    %1701 = vadd.xlane.f32.xlu0 %v1700
    %v1702 = vpop.xlane.xlu0 %1701
    %v1703 = vrot.slane %v1702, 4
    %v1704 = vadd.f32 %v1702, %v1703
    %v1705 = vrot.slane %v1704, 2
    %v1706 = vadd.f32 %v1704, %v1705
    %v1707 = vrot.slane %v1706, 1
    %v1708 = vadd.f32 %v1706, %v1707
    %s1709 = vtos %v1708
    %s1710 = smul.f32 %s1709, 0.001953125
    %1711 = vrot.lane.b32.xlu0 %v1681, 64
    %v1712 = vpop.permute.xlu0 %1711
    %v1714 = vsel %vm349, %v1712, 0.0
    %1715 = vadd.xlane.f32.xlu0 %v1714
    %v1716 = vpop.xlane.xlu0 %1715
    %v1717 = vrot.slane %v1716, 4
    %v1718 = vadd.f32 %v1716, %v1717
    %v1719 = vrot.slane %v1718, 2
    %v1720 = vadd.f32 %v1718, %v1719
    %v1721 = vrot.slane %v1720, 1
    %v1722 = vadd.f32 %v1720, %v1721
    %s1723 = vtos %v1722
    %s1724 = smul.f32 %s1723, 0.001953125
    %s1725 = smul.f32 %s1695, %s1695
    %s1726 = ssub.f32 %s1724, %s1725
    %s1727 = sadd.f32 %s1726, 1e-05
    %1728 = vrot.lane.b32.xlu0 %v1681, 32
    %v1729 = vpop.permute.xlu0 %1728
    %v1731 = vsel %vm349, %v1729, 0.0
    %1732 = vadd.xlane.f32.xlu0 %v1731
    %v1733 = vpop.xlane.xlu0 %1732
    %v1734 = vrot.slane %v1733, 4
    %v1735 = vadd.f32 %v1733, %v1734
    %v1736 = vrot.slane %v1735, 2
    %v1737 = vadd.f32 %v1735, %v1736
    %v1738 = vrot.slane %v1737, 1
    %v1739 = vadd.f32 %v1737, %v1738
    %s1740 = vtos %v1739
    %s1741 = smul.f32 %s1740, 0.001953125
    %s1742 = smul.f32 %s1710, %s1710
    %s1743 = ssub.f32 %s1741, %s1742
    %s1744 = sadd.f32 %s1743, 1e-05
    %v1745 = vsel %vm349, %v1683, 0.0
    %1746 = vadd.xlane.f32.xlu0 %v1745
    %v1747 = vpop.xlane.xlu0 %1746
    %v1748 = vrot.slane %v1747, 4
    %v1749 = vadd.f32 %v1747, %v1748
    %v1750 = vrot.slane %v1749, 2
    %v1751 = vadd.f32 %v1749, %v1750
    %v1752 = vrot.slane %v1751, 1
    %v1753 = vadd.f32 %v1751, %v1752
    %s1754 = vtos %v1753
    %s1755 = smul.f32 %s1754, 0.001953125
    %s1756 = smul.f32 %s1695, %s1710
    %s1757 = ssub.f32 %s1755, %s1756
    %s1758 = smul.f32 %s1727, %s1744
    %s1759 = smul.f32 %s1757, %s1757
    %s1760 = ssub.f32 %s1758, %s1759
    %v1761 = vstv %s1760
    %v1762 = vrsqrt.pop %v1761
    %v1763 = vmul.f32 %v1761, %v1762
    %vm1764 = vcmp.eq.f32.partialorder %v1761, inf
    %v1765 = vsel %vm1764, %v1761, %v1763
    %vm1766 = vcmp.eq.f32.partialorder %v1761, 0.0
    %v1767 = vand.u32 %v1761, 2147483648
    %v1768 = vsel %vm1766, %v1767, %v1765
    %s1769 = vtos %v1768
    %s1770 = sadd.f32 %s1727, %s1744
    %s1771 = smul.f32 %s1769, 2.0
    %s1772 = sadd.f32 %s1770, %s1771
    %v1773 = vstv %s1772
    %v1774 = vrsqrt.pop %v1773
    %v1775 = vmul.f32 %v1773, %v1774
    %vm1776 = vcmp.eq.f32.partialorder %v1773, inf
    %v1777 = vsel %vm1776, %v1773, %v1775
    %vm1778 = vcmp.eq.f32.partialorder %v1773, 0.0
    %v1779 = vand.u32 %v1773, 2147483648
    %v1780 = vsel %vm1778, %v1779, %v1777
    %s1781 = vtos %v1780
    %s1782 = smul.f32 %s1769, %s1781
    %v1783 = vstv %s1782
    %v1784 = vrcp.pop %v1783
    %s1785 = vtos %v1784
    %s1786 = sadd.f32 %s1744, %s1769
    %s1787 = smul.f32 %s1786, %s1785
    %s1788 = sadd.f32 %s1727, %s1769
    %s1789 = smul.f32 %s1788, %s1785
    %s1790 = ssub.f32 0.0, %s1757
    %s1791 = smul.f32 %s1790, %s1785
    %s1792 = smul.f32 %s40, %s1787
    %s1793 = smul.f32 %s42, %s1791
    %s1794 = sadd.f32 %s1792, %s1793
    %s1795 = smul.f32 %s40, %s1791
    %s1796 = smul.f32 %s42, %s1789
    %s1797 = sadd.f32 %s1795, %s1796
    %s1798 = smul.f32 %s42, %s1787
    %s1799 = smul.f32 %s41, %s1791
    %s1800 = sadd.f32 %s1798, %s1799
    %s1801 = smul.f32 %s41, %s1789
    %s1802 = sadd.f32 %s1793, %s1801
    %s1803 = smul.f32 %s1794, %s1695
    %s1804 = ssub.f32 %s43, %s1803
    %s1805 = smul.f32 %s1797, %s1710
    %s1806 = ssub.f32 %s1804, %s1805
    %s1807 = smul.f32 %s1800, %s1695
    %s1808 = ssub.f32 %s44, %s1807
    %s1809 = smul.f32 %s1802, %s1710
    %s1810 = ssub.f32 %s1808, %s1809
    %v1811 = vstv %s1794
    %v1812 = vmul.f32 %v1811, %v129
    %v1813 = vmul.f32 %v1811, %v133
    %v1814 = vstv %s1797
    %v1815 = vmul.f32 %v1814, %v129
    %v1816 = vmul.f32 %v1814, %v133
    %1819 = vrot.lane.b32.xlu0 %v1815, 96
    %v1820 = vpop.permute.xlu0 %1819
    %1821 = vrot.lane.b32.xlu0 %v1816, 96
    %v1822 = vpop.permute.xlu0 %1821
    %v1825 = vadd.f32 %v1812, %v1820
    %v1826 = vadd.f32 %v1813, %v1822
    %v1827 = vstv %s1806
    %v1828 = vadd.f32 %v1825, %v1827
    %v1829 = vadd.f32 %v1826, %v1827
    %v1830 = vstv %s1800
    %v1831 = vmul.f32 %v1830, %v129
    %v1832 = vmul.f32 %v1830, %v133
    %v1833 = vstv %s1802
    %v1834 = vmul.f32 %v1833, %v129
    %v1835 = vmul.f32 %v1833, %v133
    %1838 = vrot.lane.b32.xlu0 %v1834, 96
    %v1839 = vpop.permute.xlu0 %1838
    %1840 = vrot.lane.b32.xlu0 %v1835, 96
    %v1841 = vpop.permute.xlu0 %1840
    %v1844 = vadd.f32 %v1831, %v1839
    %v1845 = vadd.f32 %v1832, %v1841
    %v1846 = vstv %s1810
    %v1847 = vadd.f32 %v1844, %v1846
    %v1848 = vadd.f32 %v1845, %v1846
    %v1849 = vadd.f32 %v1828, %v1582
    %v1850 = vadd.f32 %v1829, %v1583
    %v1851 = vadd.f32 %v1847, %v1588
    %v1852 = vadd.f32 %v1848, %v1589
    %v1853 = vmul.f32 %v1849, %v1849
    %v1854 = vmul.f32 %v1850, %v1850
    %v1855 = vmul.f32 %v1851, %v1851
    %v1856 = vmul.f32 %v1852, %v1852
    %v1857 = vmul.f32 %v1849, %v1851
    %v1858 = vmul.f32 %v1850, %v1852
    %1861 = vrot.lane.b32.xlu0 %v1851, 32
    %v1862 = vpop.permute.xlu0 %1861
    %1863 = vrot.lane.b32.xlu0 %v1852, 32
    %v1864 = vpop.permute.xlu0 %1863
    %1869 = vrot.lane.b32.xlu0 %v1853, 64
    %v1870 = vpop.permute.xlu0 %1869
    %1871 = vrot.lane.b32.xlu0 %v1854, 64
    %v1872 = vpop.permute.xlu0 %1871
    %1877 = vrot.lane.b32.xlu0 %v1855, 96
    %v1878 = vpop.permute.xlu0 %1877
    %1879 = vrot.lane.b32.xlu0 %v1856, 96
    %v1880 = vpop.permute.xlu0 %1879
    %v1883 = vsel %vm88, %v1849, %v1862
    %v1884 = vsel %vm88, %v1850, %v1864
    %v1885 = vsel %vm202, %v1883, %v1870
    %v1886 = vsel %vm202, %v1884, %v1872
    %v1887 = vsel %vm271, %v1885, %v1878
    %v1888 = vsel %vm271, %v1886, %v1880
    %1889 = vmatprep.subr.mxu0 0.0
    %1890 = vmatpush1.msra.mxu0 0.0
    %1891 = vmatprep.subr.mxu0 0.0
    %1892 = vmatpush1.msra.mxu0 0.0
    %1893 = vmatprep.subr.mxu0 0.0
    %1894 = vmatpush1.msra.mxu0 0.0
    %1895 = vmatprep.subr.mxu0 0.0
    %1896 = vmatpush1.msra.mxu0 0.0
    %1897 = vmatprep.subr.mxu0 0.0
    %1898 = vmatpush1.msra.mxu0 0.0
    %1899 = vmatprep.subr.mxu0 0.0
    %1900 = vmatpush1.msra.mxu0 0.0
    %1901 = vmatprep.subr.mxu0 0.0
    %1902 = vmatpush1.msra.mxu0 0.0
    %1903 = vmatprep.subr.mxu0 0.0
    %1904 = vmatpush1.msra.mxu0 0.0
    %1905 = vmatprep.subr.mxu0 0.0
    %1906 = vmatpush1.msra.mxu0 0.0
    %1907 = vmatprep.subr.mxu0 0.0
    %1908 = vmatpush1.msra.mxu0 0.0
    %1909 = vmatprep.subr.mxu0 0.0
    %1910 = vmatpush1.msra.mxu0 0.0
    %1911 = vmatprep.subr.mxu0 0.0
    %1912 = vmatpush1.msra.mxu0 0.0
    %1913 = vmatprep.subr.mxu0 0.0
    %1914 = vmatpush1.msra.mxu0 0.0
    %1915 = vmatprep.subr.mxu0 0.0
    %1916 = vmatpush1.msra.mxu0 0.0
    %1917 = vmatprep.subr.mxu0 %v1858
    %1918 = vmatpush1.msra.mxu0 %v1888
    %1919 = vmatprep.subr.mxu0 %v1857
    %1920 = vmatpush1.msra.mxu0 %v1887
    %1921 = vmatprep.subr.mxu0 0.0
    %1922 = vmatpush2.msra.mxu0 0.0
    %1923 = vmatprep.subr.mxu0 0.0
    %1924 = vmatpush2.msra.mxu0 0.0
    %1925 = vmatprep.subr.mxu0 0.0
    %1926 = vmatpush2.msra.mxu0 0.0
    %1927 = vmatprep.subr.mxu0 0.0
    %1928 = vmatpush2.msra.mxu0 0.0
    %1929 = vmatprep.subr.mxu0 0.0
    %1930 = vmatpush2.msra.mxu0 0.0
    %1931 = vmatprep.subr.mxu0 0.0
    %1932 = vmatpush2.msra.mxu0 0.0
    %1933 = vmatprep.subr.mxu0 0.0
    %1934 = vmatpush2.msra.mxu0 0.0
    %1935 = vmatprep.subr.mxu0 0.0
    %1936 = vmatpush2.msra.mxu0 0.0
    %1937 = vmatprep.subr.mxu0 0.0
    %1938 = vmatpush2.msra.mxu0 0.0
    %1939 = vmatprep.subr.mxu0 0.0
    %1940 = vmatpush2.msra.mxu0 0.0
    %1941 = vmatprep.subr.mxu0 0.0
    %1942 = vmatpush2.msra.mxu0 0.0
    %1943 = vmatprep.subr.mxu0 0.0
    %1944 = vmatpush2.msra.mxu0 0.0
    %1945 = vmatprep.subr.mxu0 0.0
    %1946 = vmatpush2.msra.mxu0 0.0
    %1947 = vmatprep.subr.mxu0 0.0
    %1948 = vmatpush2.msra.mxu0 0.0
    %1949 = vmatprep.subr.mxu0 0.0
    %1950 = vmatpush2.msra.mxu0 0.0
    %1951 = vmatprep.subr.mxu0 0.0
    %1952 = vmatpush2.msra.mxu0 0.0
    %1953 = vmatprep.mubr.f32.mxu0 0.0
    %1954 = vmatmul.mubr.f32.gmra.mxu0 %v276
    %v1955 = vpop.f32.mrf.mxu0
    %v1956 = vadd.f32 0.0, %v1955
    %v1957 = vpop.f32.mrf.mxu0
    %v1958 = vadd.f32 0.0, %v1957
    %1959 = vdwg.mxu0
    %v1960 = vsel %vm349, %v1956, 0.0
    %1961 = vadd.xlane.f32.xlu0 %v1960
    %v1962 = vpop.xlane.xlu0 %1961
    %v1963 = vrot.slane %v1962, 4
    %v1964 = vadd.f32 %v1962, %v1963
    %v1965 = vrot.slane %v1964, 2
    %v1966 = vadd.f32 %v1964, %v1965
    %v1967 = vrot.slane %v1966, 1
    %v1968 = vadd.f32 %v1966, %v1967
    %s1969 = vtos %v1968
    %s1970 = smul.f32 %s1969, 0.001953125
    %1972 = vrot.lane.b32.xlu0 %v1956, 96
    %v1973 = vpop.permute.xlu0 %1972
    %v1975 = vsel %vm349, %v1973, 0.0
    %1976 = vadd.xlane.f32.xlu0 %v1975
    %v1977 = vpop.xlane.xlu0 %1976
    %v1978 = vrot.slane %v1977, 4
    %v1979 = vadd.f32 %v1977, %v1978
    %v1980 = vrot.slane %v1979, 2
    %v1981 = vadd.f32 %v1979, %v1980
    %v1982 = vrot.slane %v1981, 1
    %v1983 = vadd.f32 %v1981, %v1982
    %s1984 = vtos %v1983
    %s1985 = smul.f32 %s1984, 0.001953125
    %1986 = vrot.lane.b32.xlu0 %v1956, 64
    %v1987 = vpop.permute.xlu0 %1986
    %v1989 = vsel %vm349, %v1987, 0.0
    %1990 = vadd.xlane.f32.xlu0 %v1989
    %v1991 = vpop.xlane.xlu0 %1990
    %v1992 = vrot.slane %v1991, 4
    %v1993 = vadd.f32 %v1991, %v1992
    %v1994 = vrot.slane %v1993, 2
    %v1995 = vadd.f32 %v1993, %v1994
    %v1996 = vrot.slane %v1995, 1
    %v1997 = vadd.f32 %v1995, %v1996
    %s1998 = vtos %v1997
    %s1999 = smul.f32 %s1998, 0.001953125
    %s2000 = smul.f32 %s1970, %s1970
    %s2001 = ssub.f32 %s1999, %s2000
    %s2002 = sadd.f32 %s2001, 1e-05
    %2003 = vrot.lane.b32.xlu0 %v1956, 32
    %v2004 = vpop.permute.xlu0 %2003
    %v2006 = vsel %vm349, %v2004, 0.0
    %2007 = vadd.xlane.f32.xlu0 %v2006
    %v2008 = vpop.xlane.xlu0 %2007
    %v2009 = vrot.slane %v2008, 4
    %v2010 = vadd.f32 %v2008, %v2009
    %v2011 = vrot.slane %v2010, 2
    %v2012 = vadd.f32 %v2010, %v2011
    %v2013 = vrot.slane %v2012, 1
    %v2014 = vadd.f32 %v2012, %v2013
    %s2015 = vtos %v2014
    %s2016 = smul.f32 %s2015, 0.001953125
    %s2017 = smul.f32 %s1985, %s1985
    %s2018 = ssub.f32 %s2016, %s2017
    %s2019 = sadd.f32 %s2018, 1e-05
    %v2020 = vsel %vm349, %v1958, 0.0
    %2021 = vadd.xlane.f32.xlu0 %v2020
    %v2022 = vpop.xlane.xlu0 %2021
    %v2023 = vrot.slane %v2022, 4
    %v2024 = vadd.f32 %v2022, %v2023
    %v2025 = vrot.slane %v2024, 2
    %v2026 = vadd.f32 %v2024, %v2025
    %v2027 = vrot.slane %v2026, 1
    %v2028 = vadd.f32 %v2026, %v2027
    %s2029 = vtos %v2028
    %s2030 = smul.f32 %s2029, 0.001953125
    %s2031 = smul.f32 %s1970, %s1985
    %s2032 = ssub.f32 %s2030, %s2031
    %s2033 = smul.f32 %s2002, %s2019
    %s2034 = smul.f32 %s2032, %s2032
    %s2035 = ssub.f32 %s2033, %s2034
    %v2036 = vstv %s2035
    %v2037 = vrsqrt.pop %v2036
    %v2038 = vmul.f32 %v2036, %v2037
    %vm2039 = vcmp.eq.f32.partialorder %v2036, inf
    %v2040 = vsel %vm2039, %v2036, %v2038
    %vm2041 = vcmp.eq.f32.partialorder %v2036, 0.0
    %v2042 = vand.u32 %v2036, 2147483648
    %v2043 = vsel %vm2041, %v2042, %v2040
    %s2044 = vtos %v2043
    %s2045 = sadd.f32 %s2002, %s2019
    %s2046 = smul.f32 %s2044, 2.0
    %s2047 = sadd.f32 %s2045, %s2046
    %v2048 = vstv %s2047
    %v2049 = vrsqrt.pop %v2048
    %v2050 = vmul.f32 %v2048, %v2049
    %vm2051 = vcmp.eq.f32.partialorder %v2048, inf
    %v2052 = vsel %vm2051, %v2048, %v2050
    %vm2053 = vcmp.eq.f32.partialorder %v2048, 0.0
    %v2054 = vand.u32 %v2048, 2147483648
    %v2055 = vsel %vm2053, %v2054, %v2052
    %s2056 = vtos %v2055
    %s2057 = smul.f32 %s2044, %s2056
    %v2058 = vstv %s2057
    %v2059 = vrcp.pop %v2058
    %s2060 = vtos %v2059
    %s2061 = sadd.f32 %s2019, %s2044
    %s2062 = smul.f32 %s2061, %s2060
    %s2063 = sadd.f32 %s2002, %s2044
    %s2064 = smul.f32 %s2063, %s2060
    %s2065 = ssub.f32 0.0, %s2032
    %s2066 = smul.f32 %s2065, %s2060
    %s2067 = smul.f32 %s40, %s2062
    %s2068 = smul.f32 %s42, %s2066
    %s2069 = sadd.f32 %s2067, %s2068
    %s2070 = smul.f32 %s40, %s2066
    %s2071 = smul.f32 %s42, %s2064
    %s2072 = sadd.f32 %s2070, %s2071
    %s2073 = smul.f32 %s42, %s2062
    %s2074 = smul.f32 %s41, %s2066
    %s2075 = sadd.f32 %s2073, %s2074
    %s2076 = smul.f32 %s41, %s2064
    %s2077 = sadd.f32 %s2068, %s2076
    %s2078 = smul.f32 %s2069, %s1970
    %s2079 = ssub.f32 %s43, %s2078
    %s2080 = smul.f32 %s2072, %s1985
    %s2081 = ssub.f32 %s2079, %s2080
    %s2082 = smul.f32 %s2075, %s1970
    %s2083 = ssub.f32 %s44, %s2082
    %s2084 = smul.f32 %s2077, %s1985
    %s2085 = ssub.f32 %s2083, %s2084
    %v2086 = vstv %s2069
    %v2087 = vmul.f32 %v2086, %v1849
    %v2088 = vmul.f32 %v2086, %v1850
    %v2089 = vstv %s2072
    %v2090 = vmul.f32 %v2089, %v1851
    %v2091 = vmul.f32 %v2089, %v1852
    %v2092 = vadd.f32 %v2087, %v2090
    %v2093 = vadd.f32 %v2088, %v2091
    %v2094 = vstv %s2081
    %v2095 = vadd.f32 %v2092, %v2094
    %v2096 = vadd.f32 %v2093, %v2094
    %v2097 = vstv %s2075
    %v2098 = vmul.f32 %v2097, %v1849
    %v2099 = vmul.f32 %v2097, %v1850
    %v2100 = vstv %s2077
    %v2101 = vmul.f32 %v2100, %v1851
    %v2102 = vmul.f32 %v2100, %v1852
    %v2103 = vadd.f32 %v2098, %v2101
    %v2104 = vadd.f32 %v2099, %v2102
    %v2105 = vstv %s2085
    %v2106 = vadd.f32 %v2103, %v2105
    %v2107 = vadd.f32 %v2104, %v2105
    %v2108 = vtanh.pop %v2095
    %v2109 = vtanh.pop %v2096
    %v2110 = vtanh.pop %v2106
    %v2111 = vtanh.pop %v2107
    %2114 = vrot.lane.b32.xlu0 %v791, 32
    %v2115 = vpop.permute.xlu0 %2114
    %2116 = vrot.lane.b32.xlu0 %v792, 32
    %v2117 = vpop.permute.xlu0 %2116
    %2122 = vrot.lane.b32.xlu0 %v1317, 32
    %v2123 = vpop.permute.xlu0 %2122
    %2124 = vrot.lane.b32.xlu0 %v1318, 32
    %v2125 = vpop.permute.xlu0 %2124
    %2130 = vrot.lane.b32.xlu0 %v2110, 32
    %v2131 = vpop.permute.xlu0 %2130
    %2132 = vrot.lane.b32.xlu0 %v2111, 32
    %v2133 = vpop.permute.xlu0 %2132
    %v2136 = vsel %vm88, %v781, %v2115
    %v2137 = vsel %vm88, %v782, %v2117
    %v2138 = vsel %vm202, %v2136, %v1307
    %v2139 = vsel %vm202, %v2137, %v1308
    %v2140 = vsel %vm271, %v2138, %v2123
    %v2141 = vsel %vm271, %v2139, %v2125
    %v2142 = vsel %vm88, %v2108, %v2131
    %v2143 = vsel %vm88, %v2109, %v2133
    %2144 = vst [vmem:[%s7] sm:$0xff] %v2140
    %2145 = vst.msk [vmem:[%s7 + $0x8] sm:$0xff] %vm202, %v2142
    %2146 = vst [vmem:[%s7 + $0x10] sm:$0xff] %v2141
    %2147 = vst.msk [vmem:[%s7 + $0x18] sm:$0xff] %vm202, %v2143
    // Predicated region
    $region34: #{complex_bn_gru_cell.1} parent=1 // pred_check
      _
    $region35: #{complex_bn_gru_cell.1} parent=1 // pred_check_branch
      %2149 = sbr.rel (0) target = $region37
    $region36: #{complex_bn_gru_cell.1} parent=1 // pred_region
      _
    $region37: #{complex_bn_gru_cell.1} parent=1 // pred_fallthru
      _
    // Predicated region
    $region38: #{complex_bn_gru_cell.1} parent=1 // pred_check
      _
    $region39: #{complex_bn_gru_cell.1} parent=1 // pred_check_branch
      %2151 = sbr.rel (0) target = $region41
    $region40: #{complex_bn_gru_cell.1} parent=1 // pred_region
      _
    $region41: #{complex_bn_gru_cell.1} parent=1 // pred_fallthru
      _
    %2152 = vsyncpa [#allocation3], 1

</llo_original>
